<compile_context>
chip_gen: v6e
topology: v6e:2x2x1
jax: 0.10.0
libtpu: 0.0.40
codegen_flags: <defaults>
</compile_context>

<pallas_src>
import jax
import jax.numpy as jnp
from jax.experimental import pallas as pl
from jax.experimental.pallas import tpu as pltpu


# ----------------------------------------------------------------------------
# Pallas kernel: fused 1x1x1 conv (+ folded-BN bias) + ReLU on spectral planes.
#   out[co, r] = relu( sum_k w[co,k] * x[k,r] + b[co] ),  k = [real-in ; imag-in]
# Channels sit on sublanes, the flattened spectral-spatial axis (R) on lanes.
# ----------------------------------------------------------------------------
def _spectral_pointwise_kernel(x_ref, w_ref, b_ref, o_ref):
    acc = jnp.dot(w_ref[...], x_ref[...], preferred_element_type=jnp.float32)
    acc = acc + b_ref[...]                       # (2*Cout, 1) broadcast over lanes
    o_ref[...] = jnp.maximum(acc, 0.0).astype(o_ref.dtype)


def _pick_lane_tile(r, n_batch, k_rows, out_rows, max_tile=16384,
                    vmem_budget=24 * 1024 * 1024):
    """Lane-axis tile.  Grid uses cdiv, so the last block may be ragged.

    - large enough (up to 16384) that per-step DMA time hides the ~0.35 us grid
      overhead even at v7x HBM bandwidth,
    - capped so double-buffered bf16 input + output blocks stay inside a VMEM budget,
    - when n_batch == 1, split R into >= 2 tiles so v7x's 2 TensorCores both get work.
    """
    bytes_per_lane = 2 * 2 * (k_rows + out_rows)          # 2 buffers x bf16 (in + out)
    vmem_cap = max(128, (vmem_budget // bytes_per_lane) // 128 * 128)
    r_cover = pl.cdiv(r, 128) * 128                        # smallest 128-multiple >= r
    blk = min(max_tile, vmem_cap, r_cover)
    if n_batch == 1 and blk >= r_cover and r_cover > 128:
        blk = max(128, pl.cdiv(r_cover // 128, 2) * 128)   # ~half of R, 128-aligned
    return blk


def fused_spectral_conv(x_ri, w_ri, bias_col):
    """relu( w_ri @ x_ri + bias ), batched over the leading dim.

    x_ri     : (N, 2*Cin, R)      bf16   ([real planes ; imag planes] on channels)
    w_ri     : (2*Cout, 2*Cin)    bf16   (BN scale folded, columns match x_ri rows)
    bias_col : (2*Cout, 1)        f32
    returns  : (N, 2*Cout, R)     bf16   (rows = [real-out ; imag-out])
    """
    n, k, r = x_ri.shape
    co2 = w_ri.shape[0]
    r_blk = _pick_lane_tile(r, n, k, co2)
    grid = (n, pl.cdiv(r, r_blk))

    cost = pl.CostEstimate(
        flops=2 * n * co2 * k * r,
        transcendentals=0,
        bytes_accessed=(n * k * r * 2) + (co2 * k * 2) + (co2 * 4) + (n * co2 * r * 2),
    )

    return pl.pallas_call(
        _spectral_pointwise_kernel,
        out_shape=jax.ShapeDtypeStruct((n, co2, r), jnp.bfloat16),
        grid_spec=pltpu.PrefetchScalarGridSpec(
            num_scalar_prefetch=0,
            grid=grid,
            in_specs=[
                pl.BlockSpec((None, k, r_blk), lambda b, j: (b, 0, j)),
                pl.BlockSpec((co2, k), lambda b, j: (0, 0)),
                pl.BlockSpec((co2, 1), lambda b, j: (0, 0)),
            ],
            out_specs=pl.BlockSpec((None, co2, r_blk), lambda b, j: (b, 0, j)),
        ),
        compiler_params=pltpu.CompilerParams(
            dimension_semantics=("parallel", "parallel"),
            vmem_limit_bytes=32 * 1024 * 1024,
        ),
        cost_estimate=cost,
    )(x_ri, w_ri, bias_col)


# ----------------------------------------------------------------------------
# Host-side parameter preparation (tiny arrays, trace-time only).
# ----------------------------------------------------------------------------
def _fold_bn_and_deinterleave(w_pt, bn, eps=1e-5):
    """Fold inference-BN scale into the conv weight and permute from PyTorch's
    interleaved channel layout [re0, im0, re1, im1, ...] (both in and out) to a
    blocked [real..., imag...] layout, matching the kernel's stacked real/imag
    activation planes and [real-out ; imag-out] output rows.

      w_pt: (2*Cout, 2*Cin)
      returns (w_ri, bias_col):
        w_ri     : (2*Cout, 2*Cin) bf16  (rows [re-out..., im-out...],
                                          cols [re-in..., im-in...])
        bias_col : (2*Cout, 1)     f32
    """
    scale = bn['weight'] / jnp.sqrt(bn['running_var'] + eps)
    bias = bn['bias'] - bn['running_mean'] * scale

    co2, ci2 = w_pt.shape
    co, ci = co2 // 2, ci2 // 2
    w = w_pt * scale[:, None]                       # (w @ x) * s == (w * s) @ x
    # [2k+ro, 2c+ri] -> [ro*Cout+k, ri*Cin+c]
    w = w.reshape(co, 2, ci, 2).transpose(1, 0, 3, 2).reshape(co2, ci2)
    b = bias.reshape(co, 2).transpose(1, 0).reshape(co2)
    return w.astype(jnp.bfloat16), b.reshape(co2, 1).astype(jnp.float32)


# ----------------------------------------------------------------------------
# FourierUnit forward
# ----------------------------------------------------------------------------
def fourier_unit_forward(x, params, fft_norm='ortho'):
    """x: (N, C, D, H, W) f32 -> (N, Cout, D, H, W) f32 (here Cout == C)."""
    n, c, d, h, w = x.shape
    # TODO(synk): rfftn/irfftn have no Pallas TPU primitive; computed via jnp.fft (XLA).
    ffted = jnp.fft.rfftn(x, axes=(-3, -2, -1), norm=fft_norm)   # (n, c, d, h, wh) c64
    wh = ffted.shape[-1]
    r = d * h * wh

    # Single fused extraction pass over the complex64 spectrum: real and imag planes
    # stacked along the channel axis, cast to bf16, spatial dims flattened onto lanes.
    # Channels-first is already the lane-friendly layout -> no pads / transposes.
    x_ri = jnp.concatenate(
        [jnp.real(ffted), jnp.imag(ffted)], axis=1
    ).astype(jnp.bfloat16).reshape(n, 2 * c, r)

    w_ri, bias_col = _fold_bn_and_deinterleave(params['conv_w'], params['bn'])
    co2 = w_ri.shape[0]

    y = fused_spectral_conv(x_ri, w_ri, bias_col)                # (n, co2, r) bf16

    # Output rows are [real-channels ; imag-channels] -> contiguous split, then complex.
    y = y.reshape(n, 2, co2 // 2, d, h, wh).astype(jnp.float32)
    comp = jax.lax.complex(y[:, 0], y[:, 1])
    out = jnp.fft.irfftn(comp, s=(d, h, w), axes=(-3, -2, -1), norm=fft_norm)
    return out.astype(jnp.float32)


# ----------------------------------------------------------------------------
# Pure-JAX f32 reference (mirrors the PyTorch code literally, for validation).
# ----------------------------------------------------------------------------
def fourier_unit_reference(x, params, fft_norm='ortho'):
    n, c, d, h, w = x.shape
    ffted = jnp.fft.rfftn(x, axes=(-3, -2, -1), norm=fft_norm)
    wh = ffted.shape[-1]
    st = jnp.stack((jnp.real(ffted), jnp.imag(ffted)), axis=2).reshape(n, 2 * c, d, h, wh)
    y = jnp.einsum('oc,ncdhw->nodhw', params['conv_w'], st)
    scale = params['bn']['weight'] / jnp.sqrt(params['bn']['running_var'] + 1e-5)
    bias = params['bn']['bias'] - params['bn']['running_mean'] * scale
    y = jnp.maximum(y * scale[None, :, None, None, None]
                    + bias[None, :, None, None, None], 0.0)
    co2 = params['conv_w'].shape[0]
    y = y.reshape(n, co2 // 2, 2, d, h, wh)
    comp = jax.lax.complex(y[:, :, 0], y[:, :, 1])
    return jnp.fft.irfftn(comp, s=(d, h, w), axes=(-3, -2, -1), norm=fft_norm)


# ----------------------------------------------------------------------------
# Deterministic parameters (conv: 2*in_ch -> 2*out_ch, bias=False; BN inference mode).
# ----------------------------------------------------------------------------
def init_params(key, in_channels, out_channels):
    c_in2, c_out2 = 2 * in_channels, 2 * out_channels
    w = 0.2 * jax.random.normal(key, (c_out2, c_in2), jnp.float32)
    i = jnp.arange(c_out2, dtype=jnp.float32)
    bn = dict(weight=1.0 + 0.05 * i, bias=0.01 * i,
              running_mean=0.02 * i, running_var=1.0 + 0.1 * i)
    return dict(conv_w=w, bn=bn)


if __name__ == "__main__":
    key = jax.random.PRNGKey(0)
    kx, kw = jax.random.split(key)

    # FourierUnit(in_channels=8, out_channels=8), dims=3, small spatial extent.
    N, C, D, H, W = 2, 8, 4, 8, 16
    x = jax.random.normal(kx, (N, C, D, H, W), jnp.float32)
    params = init_params(kw, in_channels=C, out_channels=C)

    fwd = jax.jit(fourier_unit_forward)
    out = fwd(x, params)
    jax.block_until_ready(out)

    assert out.shape == (N, C, D, H, W), out.shape
    assert out.dtype == jnp.float32

    ref = jax.jit(fourier_unit_reference)(x, params)
    jax.block_until_ready(ref)
    max_abs_err = float(jnp.max(jnp.abs(out - ref)))
    rel_err = max_abs_err / (float(jnp.max(jnp.abs(ref))) + 1e-12)
    # bf16 matmul inputs + bf16 kernel output, f32 accumulation: expect ~1% level error.
    assert rel_err < 5e-2, f"relative err {rel_err} (max abs {max_abs_err})"
    assert max_abs_err < 1e-1, f"max abs err {max_abs_err}"

    print("KERNEL_OK")
</pallas_src>

<mosaic_0001>
module attributes {stable_mosaic.version = 11 : i64} {
  func.func @_spectral_pointwise_kernel(%arg0: i32, %arg1: i32, %arg2: memref<1x16x384xbf16, #tpu.memory_space<vmem>>, %arg3: memref<16x16xbf16, #tpu.memory_space<vmem>>, %arg4: memref<16x1xf32, #tpu.memory_space<vmem>>, %arg5: memref<1x16x384xbf16, #tpu.memory_space<vmem>>) attributes {dimension_semantics = [#tpu.dimension_semantics<parallel>, #tpu.dimension_semantics<parallel>], iteration_bounds = array<i64: 2, 1>, scalar_prefetch = 0 : i64, scratch_operands = 0 : i64, tpu.core_type = #tpu.core_type<tc>, window_params = [{transform_indices = @transform_0, window_bounds = array<i64: 1, 16, 384>}, {pipeline_mode = #tpu.pipeline_mode<synchronous>, transform_indices = @transform_1, window_bounds = array<i64: 16, 16>}, {pipeline_mode = #tpu.pipeline_mode<synchronous>, transform_indices = @transform_2, window_bounds = array<i64: 16, 1>}, {transform_indices = @transform_3, window_bounds = array<i64: 1, 16, 384>}]} {
    %c0 = arith.constant 0 : index
    %c0_0 = arith.constant 0 : index
    %0 = vector.load %arg3[%c0, %c0_0] : memref<16x16xbf16, #tpu.memory_space<vmem>>, vector<16x16xbf16>
    %c0_1 = arith.constant 0 : index
    %c0_2 = arith.constant 0 : index
    %c0_3 = arith.constant 0 : index
    %1 = vector.load %arg2[%c0_1, %c0_2, %c0_3] : memref<1x16x384xbf16, #tpu.memory_space<vmem>>, vector<1x16x384xbf16>
    %2 = vector.shape_cast %1 : vector<1x16x384xbf16> to vector<16x384xbf16>
    %cst = arith.constant dense<0.000000e+00> : vector<16x384xf32>
    %3 = tpu.matmul %0, %2, %cst {dimension_numbers = #tpu.dot_dimension_numbers<[1], [0], [0], [1], [0, 0, 1, 1], [], []>} : vector<16x16xbf16>, vector<16x384xbf16>, vector<16x384xf32> -> vector<16x384xf32>
    %c0_4 = arith.constant 0 : index
    %c0_5 = arith.constant 0 : index
    %4 = vector.load %arg4[%c0_4, %c0_5] : memref<16x1xf32, #tpu.memory_space<vmem>>, vector<16x1xf32>
    %5 = vector.broadcast %4 : vector<16x1xf32> to vector<16x384xf32>
    %6 = arith.addf %3, %5 : vector<16x384xf32>
    %cst_6 = arith.constant 0.000000e+00 : f32
    %7 = vector.broadcast %cst_6 : f32 to vector<16x384xf32>
    %8 = arith.maximumf %6, %7 : vector<16x384xf32>
    %9 = arith.truncf %8 : vector<16x384xf32> to vector<16x384xbf16>
    %c0_7 = arith.constant 0 : index
    %c0_8 = arith.constant 0 : index
    %c0_9 = arith.constant 0 : index
    %10 = vector.load %arg5[%c0_7, %c0_8, %c0_9] : memref<1x16x384xbf16, #tpu.memory_space<vmem>>, vector<1x16x384xbf16>
    %11 = vector.shape_cast %10 : vector<1x16x384xbf16> to vector<16x384xbf16>
    %12 = vector.shape_cast %9 : vector<16x384xbf16> to vector<1x16x384xbf16>
    tpu.vector_store %arg5[%c0_7, %c0_8, %c0_9], %12 {strides = array<i32>} : memref<1x16x384xbf16, #tpu.memory_space<vmem>>, vector<1x16x384xbf16>,
    return
  }
  func.func @transform_0(%arg0: i32, %arg1: i32) -> (i32, i32, i32) {
    %c0_i32 = arith.constant 0 : i32
    %c0_i32_0 = arith.constant 0 : i32
    return %arg0, %c0_i32, %arg1 : i32, i32, i32
  }
  func.func @transform_1(%arg0: i32, %arg1: i32) -> (i32, i32) {
    %c0_i32 = arith.constant 0 : i32
    %c0_i32_0 = arith.constant 0 : i32
    %c0_i32_1 = arith.constant 0 : i32
    return %c0_i32, %c0_i32_0 : i32, i32
  }
  func.func @transform_2(%arg0: i32, %arg1: i32) -> (i32, i32) {
    %c0_i32 = arith.constant 0 : i32
    %c0_i32_0 = arith.constant 0 : i32
    %c0_i32_1 = arith.constant 0 : i32
    return %c0_i32, %c0_i32_0 : i32, i32
  }
  func.func @transform_3(%arg0: i32, %arg1: i32) -> (i32, i32, i32) {
    %c0_i32 = arith.constant 0 : i32
    %c0_i32_0 = arith.constant 0 : i32
    return %arg0, %c0_i32, %arg1 : i32, i32, i32
  }
}

</mosaic_0001>

<llo_original>
// kernel: fourier_unit_forward.1
$region0: #{fourier_unit_forward.1}
  #allocation0 [shape = 'u32[]', space=smem, size = 0x4, offset = 0x4, fixed_abs, tag = 'smem constant byte address 0x4 - core index']
  #allocation1 [shape = 'u32[144,128]{1,0:T(1,128)}', space=vmem, size = 0x12000, scoped, tag = 'internal scratch']
  %s0 = inlined_call_operand.vmem [shape: bf16[2,16,288], index: 0, kind: input, shape index: {}]
  %s1 = inlined_call_operand.vmem [shape: bf16[16,16], index: 1, kind: input, shape index: {}]
  %s2 = inlined_call_operand.vmem [shape: f32[16,1], index: 2, kind: input, shape index: {}]
  %s3 = inlined_call_operand.vmem [shape: bf16[2,16,288], index: 3, kind: output, shape index: {}]
  %s4 = sld [smem:[#allocation0]]
  $region45: #{fourier_unit_forward.1} parent=0
    _
  %s6 = ssub.s32 1, %s4
  %s7 = scalar_select 0, %s6, %s4
  loop: start=0, step=1, limit=4
  $region2: #{fourier_unit_forward.1} parent=0 // loop_pre_header
    _
  $region3: #{fourier_unit_forward.1} parent=0 // loop_header
    %s9 = sphi 0, %s13
    %p10 = scmp.ge.s32.totalorder %s9, 4
    %s16 = sphi 0, %s28
    %s17 = sphi 0, %s24
    %s18 = sphi 0, %s16
    %s19 = sphi 0, %s17
    %s20 = sphi 0, %s18
    %s21 = sphi 0, %s19
    %s33 = sphi 0, %s35
    %s36 = sphi 0, %s33
    %s37 = sphi 0, %s36
    %s53 = sphi 0, %s37
    %s57 = sphi 0, %s57
    %s59 = sphi 0, %s57
    %s60 = sphi 0, %s59
    %s74 = sphi 0, %s60
    %s78 = sphi 0, %s78
    %s80 = sphi 0, %s78
    %s81 = sphi 0, %s80
    %s95 = sphi 0, %s81
    %s103 = sphi 0, %s105
    %s106 = sphi 0, %s103
    %s107 = sphi 0, %s106
    %s123 = sphi 0, %s107
  $region4: #{fourier_unit_forward.1} parent=0 // loop_header_branch
    %12 = sbr.rel (%p10) target = $region8
  $region5: #{fourier_unit_forward.1} parent=0 // loop_body
    %s14 = ssub.s32 %s9, 1
    %s15 = ssub.s32 %s9, 2
    %s22 = sadd.s32 1, %s17
    %p23 = scmp.ge.s32.totalorder %s22, 1
    %s24 = scalar_select %p23, 0, %s22
    %s25 = sadd.s32 1, %s16
    %s26 = scalar_select %p23, %s25, %s16
    %p27 = scmp.ge.s32.totalorder %s26, 2
    %s28 = scalar_select %p27, 0, %s26
    %s29 = ssub.s32 %s16, %s28
    %s30 = ssub.s32 %s17, %s24
    %s31 = sor.u32 %s29, %s30
    %p32 = scmp.eq.s32.totalorder %s31, 0
    %s34 = sadd.s32 %s33, 1
    %s35 = scalar_select %p32, %s33, %s34
    %p38 = pneg %p32
    %p39 = scmp.eq.s32.totalorder %s9, 1
    %p40 = por %p38, %p39
    %p41 = scmp.ne.s32.totalorder %s33, %s36
    %p42 = scmp.eq.s32.totalorder %s9, 0
    %p43 = por %p41, %p42
    %p44 = scmp.ne.s32.totalorder %s33, %s36
    %p45 = scmp.eq.s32.totalorder %s14, 1
    %p46 = por %p44, %p45
    %p47 = scmp.ne.s32.totalorder %s36, %s37
    %p48 = scmp.eq.s32.totalorder %s14, 0
    %p49 = por %p47, %p48
    %p50 = scmp.ne.s32.totalorder %s36, %s37
    %p51 = scmp.eq.s32.totalorder %s15, 1
    %p52 = por %p50, %p51
    %p54 = scmp.ne.s32.totalorder %s37, %s53
    %p55 = scmp.eq.s32.totalorder %s15, 0
    %p56 = por %p54, %p55
    %s58 = sadd.s32 %s57, 1
    %p61 = scmp.eq.s32.totalorder %s9, 1
    %p62 = scmp.ne.s32.totalorder %s57, %s59
    %p63 = scmp.eq.s32.totalorder %s9, 0
    %p64 = por %p62, %p63
    %p65 = scmp.ne.s32.totalorder %s57, %s59
    %p66 = scmp.eq.s32.totalorder %s14, 1
    %p67 = por %p65, %p66
    %p68 = scmp.ne.s32.totalorder %s59, %s60
    %p69 = scmp.eq.s32.totalorder %s14, 0
    %p70 = por %p68, %p69
    %p71 = scmp.ne.s32.totalorder %s59, %s60
    %p72 = scmp.eq.s32.totalorder %s15, 1
    %p73 = por %p71, %p72
    %p75 = scmp.ne.s32.totalorder %s60, %s74
    %p76 = scmp.eq.s32.totalorder %s15, 0
    %p77 = por %p75, %p76
    %s79 = sadd.s32 %s78, 1
    %p82 = scmp.eq.s32.totalorder %s9, 1
    %p83 = scmp.ne.s32.totalorder %s78, %s80
    %p84 = scmp.eq.s32.totalorder %s9, 0
    %p85 = por %p83, %p84
    %p86 = scmp.ne.s32.totalorder %s78, %s80
    %p87 = scmp.eq.s32.totalorder %s14, 1
    %p88 = por %p86, %p87
    %p89 = scmp.ne.s32.totalorder %s80, %s81
    %p90 = scmp.eq.s32.totalorder %s14, 0
    %p91 = por %p89, %p90
    %p92 = scmp.ne.s32.totalorder %s80, %s81
    %p93 = scmp.eq.s32.totalorder %s15, 1
    %p94 = por %p92, %p93
    %p96 = scmp.ne.s32.totalorder %s81, %s95
    %p97 = scmp.eq.s32.totalorder %s15, 0
    %p98 = por %p96, %p97
    %s99 = ssub.s32 %s16, %s28
    %s100 = ssub.s32 %s17, %s24
    %s101 = sor.u32 %s99, %s100
    %p102 = scmp.eq.s32.totalorder %s101, 0
    %s104 = sadd.s32 %s103, 1
    %s105 = scalar_select %p102, %s103, %s104
    %p108 = pneg %p102
    %p109 = scmp.eq.s32.totalorder %s9, 1
    %p110 = por %p108, %p109
    %p111 = scmp.ne.s32.totalorder %s103, %s106
    %p112 = scmp.eq.s32.totalorder %s9, 0
    %p113 = por %p111, %p112
    %p114 = scmp.ne.s32.totalorder %s103, %s106
    %p115 = scmp.eq.s32.totalorder %s14, 1
    %p116 = por %p114, %p115
    %p117 = scmp.ne.s32.totalorder %s106, %s107
    %p118 = scmp.eq.s32.totalorder %s14, 0
    %p119 = por %p117, %p118
    %p120 = scmp.ne.s32.totalorder %s106, %s107
    %p121 = scmp.eq.s32.totalorder %s15, 1
    %p122 = por %p120, %p121
    %p124 = scmp.ne.s32.totalorder %s107, %s123
    %p125 = scmp.eq.s32.totalorder %s15, 0
    %p126 = por %p124, %p125
    %p127 = scmp.le.s32.totalorder 1, %s9
    %p128 = scmp.lt.s32.totalorder %s9, 3
    %p129 = pnand %p127, %p128
    %p130 = pneg %p129
    // Predicated region
    $region9: #{fourier_unit_forward.1} parent=5 // pred_check
      _
    $region10: #{fourier_unit_forward.1} parent=5 // pred_check_branch
      %132 = sbr.rel (%p129) target = $region12
    $region11: #{fourier_unit_forward.1} parent=5 // pred_region
      %s133 = ssub.s32 %s9, 1
      // Predicated region
      $region13: #{fourier_unit_forward.1} parent=11 // pred_check
        %p134 = pneg %p70
      $region14: #{fourier_unit_forward.1} parent=11 // pred_check_branch
        %136 = sbr.rel (%p134) target = $region16
      $region15: #{fourier_unit_forward.1} parent=11 // pred_region
        _
      $region16: #{fourier_unit_forward.1} parent=11 // pred_fallthru
        _
      // Predicated region
      $region17: #{fourier_unit_forward.1} parent=11 // pred_check
        %p137 = pneg %p91
      $region18: #{fourier_unit_forward.1} parent=11 // pred_check_branch
        %139 = sbr.rel (%p137) target = $region20
      $region19: #{fourier_unit_forward.1} parent=11 // pred_region
        _
      $region20: #{fourier_unit_forward.1} parent=11 // pred_fallthru
        _
    $region12: #{fourier_unit_forward.1} parent=5 // pred_fallthru
      _
    %p140 = scmp.lt.s32.totalorder %s9, 2
    // Predicated region
    $region21: #{fourier_unit_forward.1} parent=5 // pred_check
      %p141 = pneg %p140
    $region22: #{fourier_unit_forward.1} parent=5 // pred_check_branch
      %143 = sbr.rel (%p141) target = $region24
    $region23: #{fourier_unit_forward.1} parent=5 // pred_region
      // Predicated region
      $region25: #{fourier_unit_forward.1} parent=23 // pred_check
        %p144 = pneg %p43
      $region26: #{fourier_unit_forward.1} parent=23 // pred_check_branch
        %146 = sbr.rel (%p144) target = $region28
      $region27: #{fourier_unit_forward.1} parent=23 // pred_region
        %s147 = smul.u32 3, %s17
        %p148 = scmp.lt.s32.totalorder %s16, 1
        %s149 = scalar_select %p148, %s16, 1
        %p150 = scmp.lt.s32.totalorder %s147, 2
        %s151 = scalar_select %p150, %s147, 2
        %s152 = smul.addr %s149, 6
        %s153 = sadd.s32 %s151, %s152
        %s154 = smul.addr %s153, 4
        %s155 = scalar_lea.vmem %s0, %s154
        %s156 = smul.u32 3, %s17
      $region28: #{fourier_unit_forward.1} parent=23 // pred_fallthru
        _
    $region24: #{fourier_unit_forward.1} parent=5 // pred_fallthru
      _
    %p157 = scmp.le.s32.totalorder 1, %s9
    %p158 = scmp.lt.s32.totalorder %s9, 3
    %p159 = pnand %p157, %p158
    %p160 = pneg %p159
    // Predicated region
    $region29: #{fourier_unit_forward.1} parent=5 // pred_check
      _
    $region30: #{fourier_unit_forward.1} parent=5 // pred_check_branch
      %162 = sbr.rel (%p159) target = $region32
    $region31: #{fourier_unit_forward.1} parent=5 // pred_region
      %s163 = ssub.s32 %s9, 1
      %s164 = smul.u32 3, %s19
      %p165 = scmp.lt.s32.totalorder %s18, 1
      %s166 = scalar_select %p165, %s18, 1
      %p167 = scmp.lt.s32.totalorder %s164, 2
      %s168 = scalar_select %p167, %s164, 2
      %s169 = smul.addr %s166, 6
      %s170 = sadd.s32 %s168, %s169
      %s171 = smul.addr %s170, 4
      %s172 = scalar_lea.vmem %s0, %s171
      %p173 = pneg %p49
      %p174 = pneg %p46
      %p175 = pneg %p70
      %p176 = pneg %p67
      %p177 = pneg %p91
      %p178 = pneg %p88
      %p179 = pneg %p119
      %p180 = pneg %p116
      %s181 = smul.u32 3, %s19
      %p182 = scmp.lt.s32.totalorder %s18, 1
      %s183 = scalar_select %p182, %s18, 1
      %p184 = scmp.lt.s32.totalorder %s181, 2
      %s185 = scalar_select %p184, %s181, 2
      %s186 = smul.addr %s183, 6
      %s187 = sadd.s32 %s185, %s186
      %s188 = smul.addr %s187, 4
      %s189 = scalar_lea.vmem %s3, %s188
      %s190 = smul.u32 3, %s19
      %p191 = scmp.lt.s32.totalorder %s18, 1
      %s192 = scalar_select %p191, %s18, 1
      %p193 = scmp.lt.s32.totalorder %s190, 2
      %s194 = scalar_select %p193, %s190, 2
      %s195 = smul.addr %s192, 6
      %s196 = sadd.s32 %s194, %s195
      %s197 = smul.addr %s196, 4
      %s198 = scalar_lea.vmem %s0, %s197
      %s199 = smul.u32 3, %s19
      %s200 = smul.u32 3, %s19
      %p201 = scmp.lt.s32.totalorder %s18, 1
      %s202 = scalar_select %p201, %s18, 1
      %p203 = scmp.lt.s32.totalorder %s200, 2
      %s204 = scalar_select %p203, %s200, 2
      %s205 = smul.addr %s202, 6
      %s206 = sadd.s32 %s204, %s205
      %s207 = smul.addr %s206, 4
      %s208 = scalar_lea.vmem %s3, %s207
      %s209 = smul.u32 3, %s19
      %v211 = vld [vmem:[%s1] sm:$0xf]
      %v212 = vld [vmem:[%s1 + $0x4] sm:$0xf]
      %v213 = vld [vmem:[%s198] sm:$0xff]
      %v214 = vld [vmem:[%s198 + $0x8] sm:$0xf]
      %v215 = vld [vmem:[%s198 + $0xc] sm:$0xff]
      %v216 = vld [vmem:[%s198 + $0x14] sm:$0xf]
      %v217 = vld [vmem:[%s2] sm:$0xff]
      %v218 = vld [vmem:[%s2 + $0x8] sm:$0xff]
      %220 = vset.pattern.permute.xlu0 0
      %221 = vperm.xlu0 %220, %v217
      %v222 = vpop.permute.xlu0 %221
      %225 = vset.pattern.permute.xlu0 0
      %226 = vperm.xlu0 %225, %v218
      %v227 = vpop.permute.xlu0 %226
      %v231 = vunpack.c.l.b16 %v211
      %v232 = vunpack.c.l.b16 %v212
      %v233 = vpack.c.b16 %v232, %v231
      %v238 = vunpack.c.l.b16 %v213
      %v239 = vunpack.c.h.b16 %v213
      %v240 = vunpack.c.l.b16 %v214
      %v241 = vunpack.c.l.b16 %v215
      %v242 = vunpack.c.h.b16 %v215
      %v243 = vunpack.c.l.b16 %v216
      %v244 = vpack.c.b16 %v241, %v238
      %v245 = vpack.c.b16 %v242, %v239
      %v246 = vpack.c.b16 %v243, %v240
      %vm250 = vcmask 130048
      %v252 = vsel %vm250, %v233, 0
      %254 = vmatprep.subr.bf16.mxu0 0
      %255 = vmatpush1.bf16.msra.mxu0 0
      %256 = vmatprep.subr.bf16.mxu0 0
      %257 = vmatpush1.bf16.msra.mxu0 0
      %258 = vmatprep.subr.bf16.mxu0 0
      %259 = vmatpush1.bf16.msra.mxu0 0
      %260 = vmatprep.subr.bf16.mxu0 0
      %261 = vmatpush1.bf16.msra.mxu0 0
      %262 = vmatprep.subr.bf16.mxu0 0
      %263 = vmatpush1.bf16.msra.mxu0 0
      %264 = vmatprep.subr.bf16.mxu0 0
      %265 = vmatpush1.bf16.msra.mxu0 0
      %266 = vmatprep.subr.bf16.mxu0 0
      %267 = vmatpush1.bf16.msra.mxu0 0
      %268 = vmatprep.subr.bf16.mxu0 %v245
      %269 = vmatpush1.bf16.msra.mxu0 %v244
      %270 = vmatprep.subr.bf16.mxu0 0
      %271 = vmatpush2.bf16.msra.mxu0 0
      %272 = vmatprep.subr.bf16.mxu0 0
      %273 = vmatpush2.bf16.msra.mxu0 0
      %274 = vmatprep.subr.bf16.mxu0 0
      %275 = vmatpush2.bf16.msra.mxu0 0
      %276 = vmatprep.subr.bf16.mxu0 0
      %277 = vmatpush2.bf16.msra.mxu0 0
      %278 = vmatprep.subr.bf16.mxu0 0
      %279 = vmatpush2.bf16.msra.mxu0 0
      %280 = vmatprep.subr.bf16.mxu0 0
      %281 = vmatpush2.bf16.msra.mxu0 0
      %282 = vmatprep.subr.bf16.mxu0 0
      %283 = vmatpush2.bf16.msra.mxu0 0
      %284 = vmatprep.subr.bf16.mxu0 0
      %285 = vmatpush2.bf16.msra.mxu0 0
      %286 = vmatprep.mubr.bf16.mxu0 0
      %287 = vmatmul.mubr.bf16.gmra.mxu0 %v252
      %v288 = vpop.f32.mrf.mxu0
      %v289 = vadd.f32 %v222, %v288
      %v290 = vpop.f32.mrf.mxu0
      %v291 = vadd.f32 %v222, %v290
      %v292 = vpop.f32.mrf.mxu0
      %v293 = vadd.f32 %v227, %v292
      %v294 = vpop.f32.mrf.mxu0
      %v295 = vadd.f32 %v227, %v294
      %296 = vdwg.mxu0
      %297 = vmatprep.subr.bf16.mxu0 0
      %298 = vmatpush1.bf16.msra.mxu0 0
      %299 = vmatprep.subr.bf16.mxu0 0
      %300 = vmatpush1.bf16.msra.mxu0 0
      %301 = vmatprep.subr.bf16.mxu0 0
      %302 = vmatpush1.bf16.msra.mxu0 0
      %303 = vmatprep.subr.bf16.mxu0 0
      %304 = vmatpush1.bf16.msra.mxu0 0
      %305 = vmatprep.subr.bf16.mxu0 0
      %306 = vmatpush1.bf16.msra.mxu0 0
      %307 = vmatprep.subr.bf16.mxu0 0
      %308 = vmatpush1.bf16.msra.mxu0 0
      %309 = vmatprep.subr.bf16.mxu0 0
      %310 = vmatpush1.bf16.msra.mxu0 0
      %311 = vmatprep.subr.bf16.mxu0 0
      %312 = vmatpush1.bf16.msra.mxu0 %v246
      %313 = vmatprep.subr.bf16.mxu0 0
      %314 = vmatpush2.bf16.msra.mxu0 0
      %315 = vmatprep.subr.bf16.mxu0 0
      %316 = vmatpush2.bf16.msra.mxu0 0
      %317 = vmatprep.subr.bf16.mxu0 0
      %318 = vmatpush2.bf16.msra.mxu0 0
      %319 = vmatprep.subr.bf16.mxu0 0
      %320 = vmatpush2.bf16.msra.mxu0 0
      %321 = vmatprep.subr.bf16.mxu0 0
      %322 = vmatpush2.bf16.msra.mxu0 0
      %323 = vmatprep.subr.bf16.mxu0 0
      %324 = vmatpush2.bf16.msra.mxu0 0
      %325 = vmatprep.subr.bf16.mxu0 0
      %326 = vmatpush2.bf16.msra.mxu0 0
      %327 = vmatprep.subr.bf16.mxu0 0
      %328 = vmatpush2.bf16.msra.mxu0 0
      %329 = vmatprep.mubr.bf16.mxu0 0
      %330 = vmatmul.mubr.bf16.gmra.mxu0 %v252
      %v331 = vpop.f32.mrf.mxu0
      %v332 = vadd.f32 %v222, %v331
      %v333 = vpop.f32.mrf.mxu0
      %v334 = vpop.f32.mrf.mxu0
      %v335 = vadd.f32 %v227, %v334
      %v336 = vpop.f32.mrf.mxu0
      %337 = vdwg.mxu0
      %v338 = vmax.f32 %v289, 0.0
      %v339 = vmax.f32 %v291, 0.0
      %v340 = vmax.f32 %v332, 0.0
      %v341 = vmax.f32 %v293, 0.0
      %v342 = vmax.f32 %v295, 0.0
      %v343 = vmax.f32 %v335, 0.0
      %v344 = vpack.c.bf16 %v341, %v338
      %v345 = vpack.c.bf16 %v342, %v339
      %v346 = vpack.c.bf16 %v343, %v340
      %v350 = vunpack.c.l.b16 %v344
      %v351 = vunpack.c.l.b16 %v345
      %v352 = vunpack.c.l.b16 %v346
      %v353 = vunpack.c.h.b16 %v344
      %v354 = vunpack.c.h.b16 %v345
      %v355 = vunpack.c.h.b16 %v346
      %v356 = vpack.c.b16 %v351, %v350
      %v357 = vpack.c.b16 %v352, %v352
      %v358 = vpack.c.b16 %v354, %v353
      %v359 = vpack.c.b16 %v355, %v355
      %364 = vst [vmem:[%s208] sm:$0xff] %v356
      %365 = vst [vmem:[%s208 + $0x8] sm:$0xf] %v357
      %366 = vst [vmem:[%s208 + $0xc] sm:$0xff] %v358
      %367 = vst [vmem:[%s208 + $0x14] sm:$0xf] %v359
      %s368 = smul.u32 3, %s19
      %p369 = scmp.lt.s32.totalorder %s18, 1
      %s370 = scalar_select %p369, %s18, 1
      %p371 = scmp.lt.s32.totalorder %s368, 2
      %s372 = scalar_select %p371, %s368, 2
      %s373 = smul.addr %s370, 6
      %s374 = sadd.s32 %s372, %s373
      %s375 = smul.addr %s374, 4
      %s376 = scalar_lea.vmem %s3, %s375
      // Predicated region
      $region33: #{fourier_unit_forward.1} parent=31 // pred_check
        %p377 = pneg %p116
      $region34: #{fourier_unit_forward.1} parent=31 // pred_check_branch
        %379 = sbr.rel (%p377) target = $region36
      $region35: #{fourier_unit_forward.1} parent=31 // pred_region
        %s380 = smul.u32 3, %s19
      $region36: #{fourier_unit_forward.1} parent=31 // pred_fallthru
        _
    $region32: #{fourier_unit_forward.1} parent=5 // pred_fallthru
      _
    %p381 = scmp.le.s32.totalorder 2, %s9
    // Predicated region
    $region37: #{fourier_unit_forward.1} parent=5 // pred_check
      %p382 = pneg %p381
    $region38: #{fourier_unit_forward.1} parent=5 // pred_check_branch
      %384 = sbr.rel (%p382) target = $region40
    $region39: #{fourier_unit_forward.1} parent=5 // pred_region
      %s385 = ssub.s32 %s9, 2
      // Predicated region
      $region41: #{fourier_unit_forward.1} parent=39 // pred_check
        %p386 = pneg %p122
      $region42: #{fourier_unit_forward.1} parent=39 // pred_check_branch
        %388 = sbr.rel (%p386) target = $region44
      $region43: #{fourier_unit_forward.1} parent=39 // pred_region
        %s389 = smul.u32 3, %s21
        %p390 = scmp.lt.s32.totalorder %s20, 1
        %s391 = scalar_select %p390, %s20, 1
        %p392 = scmp.lt.s32.totalorder %s389, 2
        %s393 = scalar_select %p392, %s389, 2
        %s394 = smul.addr %s391, 6
        %s395 = sadd.s32 %s393, %s394
        %s396 = smul.addr %s395, 4
        %s397 = scalar_lea.vmem %s3, %s396
      $region44: #{fourier_unit_forward.1} parent=39 // pred_fallthru
        _
    $region40: #{fourier_unit_forward.1} parent=5 // pred_fallthru
      _
  $region6: #{fourier_unit_forward.1} parent=0 // loop_footer
    %s13 = sadd.s32 1, %s9
  $region7: #{fourier_unit_forward.1} parent=0 // loop_footer_branch
    %8 = sbr.rel target = $region3
  $region8: #{fourier_unit_forward.1} parent=0 // loop_exit
    _

// kernel: reverse.1
$region0: #{reverse.1}
  %s0 = inlined_call_operand.vmem [shape: f32[2,8,4,8,7], index: 0, kind: input, shape index: {}]
  %s1 = inlined_call_operand.vmem [shape: f32[2,8,4,8,7], index: 1, kind: output, shape index: {}]
  %v2 = vlaneseq
  %v3 = vsub.s32 6, %v2
  %4 = vset.pattern.permute.xlu0 %v3
  $region1: #{reverse.1} parent=0
    #allocation0 [shape = 'u8[262144]{0}', space=vmem, size = 0x40000, scoped, tag = 'operand span for operand 0']
    #allocation1 [shape = 'u8[262144]{0}', space=vmem, size = 0x40000, scoped, tag = 'operand span for operand 1']
    // Predicated region
    $region2: #{reverse.1} parent=1 // pred_check
      _
    $region3: #{reverse.1} parent=1 // pred_check_branch
      %6 = sbr.rel (0) target = $region5
    $region4: #{reverse.1} parent=1 // pred_region
      // Predicated region
      $region6: #{reverse.1} parent=4 // pred_check
        _
      $region7: #{reverse.1} parent=4 // pred_check_branch
        %8 = sbr.rel (0) target = $region9
      $region8: #{reverse.1} parent=4 // pred_region
        // Predicated region
        $region21: #{reverse.1} parent=8 // pred_check
          _
        $region22: #{reverse.1} parent=8 // pred_check_branch
          %150 = sbr.rel (0) target = $region24
        $region23: #{reverse.1} parent=8 // pred_region
          loop: start=0, step=1, limit=1
          $region25: #{reverse.1} parent=23 // loop_pre_header
            _
          $region26: #{reverse.1} parent=23 // loop_header
            %s152 = sphi 0, %s156
            %p153 = scmp.ge.s32.totalorder %s152, 1
            %s157 = sphi %s0, %s0
            %s158 = sphi [#allocation0], [#allocation0]
          $region27: #{reverse.1} parent=23 // loop_header_branch
            %155 = sbr.rel (%p153) target = $region31
          $region28: #{reverse.1} parent=23 // loop_body
            %v159 = vld [vmem:[%s157] sm:$0xff]
            %160 = vst [vmem:[%s158] sm:$0xff] %v159
            %v161 = vld [vmem:[%s157 + $0x8] sm:$0xff]
            %162 = vst [vmem:[%s158 + $0x8] sm:$0xff] %v161
            %v163 = vld [vmem:[%s157 + $0x10] sm:$0xff]
            %164 = vst [vmem:[%s158 + $0x10] sm:$0xff] %v163
            %v165 = vld [vmem:[%s157 + $0x18] sm:$0xff]
            %166 = vst [vmem:[%s158 + $0x18] sm:$0xff] %v165
            %v167 = vld [vmem:[%s157 + $0x20] sm:$0xff]
            %168 = vst [vmem:[%s158 + $0x20] sm:$0xff] %v167
            %v169 = vld [vmem:[%s157 + $0x28] sm:$0xff]
            %170 = vst [vmem:[%s158 + $0x28] sm:$0xff] %v169
            %v171 = vld [vmem:[%s157 + $0x30] sm:$0xff]
            %172 = vst [vmem:[%s158 + $0x30] sm:$0xff] %v171
            %v173 = vld [vmem:[%s157 + $0x38] sm:$0xff]
            %174 = vst [vmem:[%s158 + $0x38] sm:$0xff] %v173
            %v175 = vld [vmem:[%s157 + $0x40] sm:$0xff]
            %176 = vst [vmem:[%s158 + $0x40] sm:$0xff] %v175
            %v177 = vld [vmem:[%s157 + $0x48] sm:$0xff]
            %178 = vst [vmem:[%s158 + $0x48] sm:$0xff] %v177
            %v179 = vld [vmem:[%s157 + $0x50] sm:$0xff]
            %180 = vst [vmem:[%s158 + $0x50] sm:$0xff] %v179
            %v181 = vld [vmem:[%s157 + $0x58] sm:$0xff]
            %182 = vst [vmem:[%s158 + $0x58] sm:$0xff] %v181
            %v183 = vld [vmem:[%s157 + $0x60] sm:$0xff]
            %184 = vst [vmem:[%s158 + $0x60] sm:$0xff] %v183
            %v185 = vld [vmem:[%s157 + $0x68] sm:$0xff]
            %186 = vst [vmem:[%s158 + $0x68] sm:$0xff] %v185
            %v187 = vld [vmem:[%s157 + $0x70] sm:$0xff]
            %188 = vst [vmem:[%s158 + $0x70] sm:$0xff] %v187
            %v189 = vld [vmem:[%s157 + $0x78] sm:$0xff]
            %190 = vst [vmem:[%s158 + $0x78] sm:$0xff] %v189
            %v191 = vld [vmem:[%s157 + $0x80] sm:$0xff]
            %192 = vst [vmem:[%s158 + $0x80] sm:$0xff] %v191
            %v193 = vld [vmem:[%s157 + $0x88] sm:$0xff]
            %194 = vst [vmem:[%s158 + $0x88] sm:$0xff] %v193
            %v195 = vld [vmem:[%s157 + $0x90] sm:$0xff]
            %196 = vst [vmem:[%s158 + $0x90] sm:$0xff] %v195
            %v197 = vld [vmem:[%s157 + $0x98] sm:$0xff]
            %198 = vst [vmem:[%s158 + $0x98] sm:$0xff] %v197
            %v199 = vld [vmem:[%s157 + $0xa0] sm:$0xff]
            %200 = vst [vmem:[%s158 + $0xa0] sm:$0xff] %v199
            %v201 = vld [vmem:[%s157 + $0xa8] sm:$0xff]
            %202 = vst [vmem:[%s158 + $0xa8] sm:$0xff] %v201
            %v203 = vld [vmem:[%s157 + $0xb0] sm:$0xff]
            %204 = vst [vmem:[%s158 + $0xb0] sm:$0xff] %v203
            %v205 = vld [vmem:[%s157 + $0xb8] sm:$0xff]
            %206 = vst [vmem:[%s158 + $0xb8] sm:$0xff] %v205
            %v207 = vld [vmem:[%s157 + $0xc0] sm:$0xff]
            %208 = vst [vmem:[%s158 + $0xc0] sm:$0xff] %v207
            %v209 = vld [vmem:[%s157 + $0xc8] sm:$0xff]
            %210 = vst [vmem:[%s158 + $0xc8] sm:$0xff] %v209
            %v211 = vld [vmem:[%s157 + $0xd0] sm:$0xff]
            %212 = vst [vmem:[%s158 + $0xd0] sm:$0xff] %v211
            %v213 = vld [vmem:[%s157 + $0xd8] sm:$0xff]
            %214 = vst [vmem:[%s158 + $0xd8] sm:$0xff] %v213
            %v215 = vld [vmem:[%s157 + $0xe0] sm:$0xff]
            %216 = vst [vmem:[%s158 + $0xe0] sm:$0xff] %v215
            %v217 = vld [vmem:[%s157 + $0xe8] sm:$0xff]
            %218 = vst [vmem:[%s158 + $0xe8] sm:$0xff] %v217
            %v219 = vld [vmem:[%s157 + $0xf0] sm:$0xff]
            %220 = vst [vmem:[%s158 + $0xf0] sm:$0xff] %v219
            %v221 = vld [vmem:[%s157 + $0xf8] sm:$0xff]
            %222 = vst [vmem:[%s158 + $0xf8] sm:$0xff] %v221
            %v223 = vld [vmem:[%s157 + $0x100] sm:$0xff]
            %224 = vst [vmem:[%s158 + $0x100] sm:$0xff] %v223
            %v225 = vld [vmem:[%s157 + $0x108] sm:$0xff]
            %226 = vst [vmem:[%s158 + $0x108] sm:$0xff] %v225
            %v227 = vld [vmem:[%s157 + $0x110] sm:$0xff]
            %228 = vst [vmem:[%s158 + $0x110] sm:$0xff] %v227
            %v229 = vld [vmem:[%s157 + $0x118] sm:$0xff]
            %230 = vst [vmem:[%s158 + $0x118] sm:$0xff] %v229
            %v231 = vld [vmem:[%s157 + $0x120] sm:$0xff]
            %232 = vst [vmem:[%s158 + $0x120] sm:$0xff] %v231
            %v233 = vld [vmem:[%s157 + $0x128] sm:$0xff]
            %234 = vst [vmem:[%s158 + $0x128] sm:$0xff] %v233
            %v235 = vld [vmem:[%s157 + $0x130] sm:$0xff]
            %236 = vst [vmem:[%s158 + $0x130] sm:$0xff] %v235
            %v237 = vld [vmem:[%s157 + $0x138] sm:$0xff]
            %238 = vst [vmem:[%s158 + $0x138] sm:$0xff] %v237
            %v239 = vld [vmem:[%s157 + $0x140] sm:$0xff]
            %240 = vst [vmem:[%s158 + $0x140] sm:$0xff] %v239
            %v241 = vld [vmem:[%s157 + $0x148] sm:$0xff]
            %242 = vst [vmem:[%s158 + $0x148] sm:$0xff] %v241
            %v243 = vld [vmem:[%s157 + $0x150] sm:$0xff]
            %244 = vst [vmem:[%s158 + $0x150] sm:$0xff] %v243
            %v245 = vld [vmem:[%s157 + $0x158] sm:$0xff]
            %246 = vst [vmem:[%s158 + $0x158] sm:$0xff] %v245
            %v247 = vld [vmem:[%s157 + $0x160] sm:$0xff]
            %248 = vst [vmem:[%s158 + $0x160] sm:$0xff] %v247
            %v249 = vld [vmem:[%s157 + $0x168] sm:$0xff]
            %250 = vst [vmem:[%s158 + $0x168] sm:$0xff] %v249
            %v251 = vld [vmem:[%s157 + $0x170] sm:$0xff]
            %252 = vst [vmem:[%s158 + $0x170] sm:$0xff] %v251
            %v253 = vld [vmem:[%s157 + $0x178] sm:$0xff]
            %254 = vst [vmem:[%s158 + $0x178] sm:$0xff] %v253
            %v255 = vld [vmem:[%s157 + $0x180] sm:$0xff]
            %256 = vst [vmem:[%s158 + $0x180] sm:$0xff] %v255
            %v257 = vld [vmem:[%s157 + $0x188] sm:$0xff]
            %258 = vst [vmem:[%s158 + $0x188] sm:$0xff] %v257
            %v259 = vld [vmem:[%s157 + $0x190] sm:$0xff]
            %260 = vst [vmem:[%s158 + $0x190] sm:$0xff] %v259
            %v261 = vld [vmem:[%s157 + $0x198] sm:$0xff]
            %262 = vst [vmem:[%s158 + $0x198] sm:$0xff] %v261
            %v263 = vld [vmem:[%s157 + $0x1a0] sm:$0xff]
            %264 = vst [vmem:[%s158 + $0x1a0] sm:$0xff] %v263
            %v265 = vld [vmem:[%s157 + $0x1a8] sm:$0xff]
            %266 = vst [vmem:[%s158 + $0x1a8] sm:$0xff] %v265
            %v267 = vld [vmem:[%s157 + $0x1b0] sm:$0xff]
            %268 = vst [vmem:[%s158 + $0x1b0] sm:$0xff] %v267
            %v269 = vld [vmem:[%s157 + $0x1b8] sm:$0xff]
            %270 = vst [vmem:[%s158 + $0x1b8] sm:$0xff] %v269
            %v271 = vld [vmem:[%s157 + $0x1c0] sm:$0xff]
            %272 = vst [vmem:[%s158 + $0x1c0] sm:$0xff] %v271
            %v273 = vld [vmem:[%s157 + $0x1c8] sm:$0xff]
            %274 = vst [vmem:[%s158 + $0x1c8] sm:$0xff] %v273
            %v275 = vld [vmem:[%s157 + $0x1d0] sm:$0xff]
            %276 = vst [vmem:[%s158 + $0x1d0] sm:$0xff] %v275
            %v277 = vld [vmem:[%s157 + $0x1d8] sm:$0xff]
            %278 = vst [vmem:[%s158 + $0x1d8] sm:$0xff] %v277
            %v279 = vld [vmem:[%s157 + $0x1e0] sm:$0xff]
            %280 = vst [vmem:[%s158 + $0x1e0] sm:$0xff] %v279
            %v281 = vld [vmem:[%s157 + $0x1e8] sm:$0xff]
            %282 = vst [vmem:[%s158 + $0x1e8] sm:$0xff] %v281
            %v283 = vld [vmem:[%s157 + $0x1f0] sm:$0xff]
            %284 = vst [vmem:[%s158 + $0x1f0] sm:$0xff] %v283
            %v285 = vld [vmem:[%s157 + $0x1f8] sm:$0xff]
            %286 = vst [vmem:[%s158 + $0x1f8] sm:$0xff] %v285
          $region29: #{reverse.1} parent=23 // loop_footer
            %s156 = sadd.s32 1, %s152
          $region30: #{reverse.1} parent=23 // loop_footer_branch
            %151 = sbr.rel target = $region26
          $region31: #{reverse.1} parent=23 // loop_exit
            _
        $region24: #{reverse.1} parent=8 // pred_fallthru
          _
        // Predicated region
        $region32: #{reverse.1} parent=8 // pred_check
          _
        $region33: #{reverse.1} parent=8 // pred_check_branch
          %288 = sbr.rel target = $region35
        $region34: #{reverse.1} parent=8 // pred_region
          _
        $region35: #{reverse.1} parent=8 // pred_fallthru
          _
      $region9: #{reverse.1} parent=4 // pred_fallthru
        _
      // Predicated region
      $region10: #{reverse.1} parent=4 // pred_check
        _
      $region11: #{reverse.1} parent=4 // pred_check_branch
        %10 = sbr.rel target = $region13
      $region12: #{reverse.1} parent=4 // pred_region
        %s12 = ssub.s32 256, 1
        loop: start=0, step=1, limit=1
        $region14: #{reverse.1} parent=12 // loop_pre_header
          _
        $region15: #{reverse.1} parent=12 // loop_header
          %s14 = sphi 0, %s18
          %p15 = scmp.ge.s32.totalorder %s14, 1
          %s19 = sphi %s0, %s0
          %s20 = sphi [#allocation0], [#allocation0]
        $region16: #{reverse.1} parent=12 // loop_header_branch
          %17 = sbr.rel (%p15) target = $region20
        $region17: #{reverse.1} parent=12 // loop_body
          %v21 = vld [vmem:[%s19] sm:%s12]
          %22 = vst [vmem:[%s20] sm:%s12] %v21
          %v23 = vld [vmem:[%s19 + $0x8] sm:%s12]
          %24 = vst [vmem:[%s20 + $0x8] sm:%s12] %v23
          %v25 = vld [vmem:[%s19 + $0x10] sm:%s12]
          %26 = vst [vmem:[%s20 + $0x10] sm:%s12] %v25
          %v27 = vld [vmem:[%s19 + $0x18] sm:%s12]
          %28 = vst [vmem:[%s20 + $0x18] sm:%s12] %v27
          %v29 = vld [vmem:[%s19 + $0x20] sm:%s12]
          %30 = vst [vmem:[%s20 + $0x20] sm:%s12] %v29
          %v31 = vld [vmem:[%s19 + $0x28] sm:%s12]
          %32 = vst [vmem:[%s20 + $0x28] sm:%s12] %v31
          %v33 = vld [vmem:[%s19 + $0x30] sm:%s12]
          %34 = vst [vmem:[%s20 + $0x30] sm:%s12] %v33
          %v35 = vld [vmem:[%s19 + $0x38] sm:%s12]
          %36 = vst [vmem:[%s20 + $0x38] sm:%s12] %v35
          %v37 = vld [vmem:[%s19 + $0x40] sm:%s12]
          %38 = vst [vmem:[%s20 + $0x40] sm:%s12] %v37
          %v39 = vld [vmem:[%s19 + $0x48] sm:%s12]
          %40 = vst [vmem:[%s20 + $0x48] sm:%s12] %v39
          %v41 = vld [vmem:[%s19 + $0x50] sm:%s12]
          %42 = vst [vmem:[%s20 + $0x50] sm:%s12] %v41
          %v43 = vld [vmem:[%s19 + $0x58] sm:%s12]
          %44 = vst [vmem:[%s20 + $0x58] sm:%s12] %v43
          %v45 = vld [vmem:[%s19 + $0x60] sm:%s12]
          %46 = vst [vmem:[%s20 + $0x60] sm:%s12] %v45
          %v47 = vld [vmem:[%s19 + $0x68] sm:%s12]
          %48 = vst [vmem:[%s20 + $0x68] sm:%s12] %v47
          %v49 = vld [vmem:[%s19 + $0x70] sm:%s12]
          %50 = vst [vmem:[%s20 + $0x70] sm:%s12] %v49
          %v51 = vld [vmem:[%s19 + $0x78] sm:%s12]
          %52 = vst [vmem:[%s20 + $0x78] sm:%s12] %v51
          %v53 = vld [vmem:[%s19 + $0x80] sm:%s12]
          %54 = vst [vmem:[%s20 + $0x80] sm:%s12] %v53
          %v55 = vld [vmem:[%s19 + $0x88] sm:%s12]
          %56 = vst [vmem:[%s20 + $0x88] sm:%s12] %v55
          %v57 = vld [vmem:[%s19 + $0x90] sm:%s12]
          %58 = vst [vmem:[%s20 + $0x90] sm:%s12] %v57
          %v59 = vld [vmem:[%s19 + $0x98] sm:%s12]
          %60 = vst [vmem:[%s20 + $0x98] sm:%s12] %v59
          %v61 = vld [vmem:[%s19 + $0xa0] sm:%s12]
          %62 = vst [vmem:[%s20 + $0xa0] sm:%s12] %v61
          %v63 = vld [vmem:[%s19 + $0xa8] sm:%s12]
          %64 = vst [vmem:[%s20 + $0xa8] sm:%s12] %v63
          %v65 = vld [vmem:[%s19 + $0xb0] sm:%s12]
          %66 = vst [vmem:[%s20 + $0xb0] sm:%s12] %v65
          %v67 = vld [vmem:[%s19 + $0xb8] sm:%s12]
          %68 = vst [vmem:[%s20 + $0xb8] sm:%s12] %v67
          %v69 = vld [vmem:[%s19 + $0xc0] sm:%s12]
          %70 = vst [vmem:[%s20 + $0xc0] sm:%s12] %v69
          %v71 = vld [vmem:[%s19 + $0xc8] sm:%s12]
          %72 = vst [vmem:[%s20 + $0xc8] sm:%s12] %v71
          %v73 = vld [vmem:[%s19 + $0xd0] sm:%s12]
          %74 = vst [vmem:[%s20 + $0xd0] sm:%s12] %v73
          %v75 = vld [vmem:[%s19 + $0xd8] sm:%s12]
          %76 = vst [vmem:[%s20 + $0xd8] sm:%s12] %v75
          %v77 = vld [vmem:[%s19 + $0xe0] sm:%s12]
          %78 = vst [vmem:[%s20 + $0xe0] sm:%s12] %v77
          %v79 = vld [vmem:[%s19 + $0xe8] sm:%s12]
          %80 = vst [vmem:[%s20 + $0xe8] sm:%s12] %v79
          %v81 = vld [vmem:[%s19 + $0xf0] sm:%s12]
          %82 = vst [vmem:[%s20 + $0xf0] sm:%s12] %v81
          %v83 = vld [vmem:[%s19 + $0xf8] sm:%s12]
          %84 = vst [vmem:[%s20 + $0xf8] sm:%s12] %v83
          %v85 = vld [vmem:[%s19 + $0x100] sm:%s12]
          %86 = vst [vmem:[%s20 + $0x100] sm:%s12] %v85
          %v87 = vld [vmem:[%s19 + $0x108] sm:%s12]
          %88 = vst [vmem:[%s20 + $0x108] sm:%s12] %v87
          %v89 = vld [vmem:[%s19 + $0x110] sm:%s12]
          %90 = vst [vmem:[%s20 + $0x110] sm:%s12] %v89
          %v91 = vld [vmem:[%s19 + $0x118] sm:%s12]
          %92 = vst [vmem:[%s20 + $0x118] sm:%s12] %v91
          %v93 = vld [vmem:[%s19 + $0x120] sm:%s12]
          %94 = vst [vmem:[%s20 + $0x120] sm:%s12] %v93
          %v95 = vld [vmem:[%s19 + $0x128] sm:%s12]
          %96 = vst [vmem:[%s20 + $0x128] sm:%s12] %v95
          %v97 = vld [vmem:[%s19 + $0x130] sm:%s12]
          %98 = vst [vmem:[%s20 + $0x130] sm:%s12] %v97
          %v99 = vld [vmem:[%s19 + $0x138] sm:%s12]
          %100 = vst [vmem:[%s20 + $0x138] sm:%s12] %v99
          %v101 = vld [vmem:[%s19 + $0x140] sm:%s12]
          %102 = vst [vmem:[%s20 + $0x140] sm:%s12] %v101
          %v103 = vld [vmem:[%s19 + $0x148] sm:%s12]
          %104 = vst [vmem:[%s20 + $0x148] sm:%s12] %v103
          %v105 = vld [vmem:[%s19 + $0x150] sm:%s12]
          %106 = vst [vmem:[%s20 + $0x150] sm:%s12] %v105
          %v107 = vld [vmem:[%s19 + $0x158] sm:%s12]
          %108 = vst [vmem:[%s20 + $0x158] sm:%s12] %v107
          %v109 = vld [vmem:[%s19 + $0x160] sm:%s12]
          %110 = vst [vmem:[%s20 + $0x160] sm:%s12] %v109
          %v111 = vld [vmem:[%s19 + $0x168] sm:%s12]
          %112 = vst [vmem:[%s20 + $0x168] sm:%s12] %v111
          %v113 = vld [vmem:[%s19 + $0x170] sm:%s12]
          %114 = vst [vmem:[%s20 + $0x170] sm:%s12] %v113
          %v115 = vld [vmem:[%s19 + $0x178] sm:%s12]
          %116 = vst [vmem:[%s20 + $0x178] sm:%s12] %v115
          %v117 = vld [vmem:[%s19 + $0x180] sm:%s12]
          %118 = vst [vmem:[%s20 + $0x180] sm:%s12] %v117
          %v119 = vld [vmem:[%s19 + $0x188] sm:%s12]
          %120 = vst [vmem:[%s20 + $0x188] sm:%s12] %v119
          %v121 = vld [vmem:[%s19 + $0x190] sm:%s12]
          %122 = vst [vmem:[%s20 + $0x190] sm:%s12] %v121
          %v123 = vld [vmem:[%s19 + $0x198] sm:%s12]
          %124 = vst [vmem:[%s20 + $0x198] sm:%s12] %v123
          %v125 = vld [vmem:[%s19 + $0x1a0] sm:%s12]
          %126 = vst [vmem:[%s20 + $0x1a0] sm:%s12] %v125
          %v127 = vld [vmem:[%s19 + $0x1a8] sm:%s12]
          %128 = vst [vmem:[%s20 + $0x1a8] sm:%s12] %v127
          %v129 = vld [vmem:[%s19 + $0x1b0] sm:%s12]
          %130 = vst [vmem:[%s20 + $0x1b0] sm:%s12] %v129
          %v131 = vld [vmem:[%s19 + $0x1b8] sm:%s12]
          %132 = vst [vmem:[%s20 + $0x1b8] sm:%s12] %v131
          %v133 = vld [vmem:[%s19 + $0x1c0] sm:%s12]
          %134 = vst [vmem:[%s20 + $0x1c0] sm:%s12] %v133
          %v135 = vld [vmem:[%s19 + $0x1c8] sm:%s12]
          %136 = vst [vmem:[%s20 + $0x1c8] sm:%s12] %v135
          %v137 = vld [vmem:[%s19 + $0x1d0] sm:%s12]
          %138 = vst [vmem:[%s20 + $0x1d0] sm:%s12] %v137
          %v139 = vld [vmem:[%s19 + $0x1d8] sm:%s12]
          %140 = vst [vmem:[%s20 + $0x1d8] sm:%s12] %v139
          %v141 = vld [vmem:[%s19 + $0x1e0] sm:%s12]
          %142 = vst [vmem:[%s20 + $0x1e0] sm:%s12] %v141
          %v143 = vld [vmem:[%s19 + $0x1e8] sm:%s12]
          %144 = vst [vmem:[%s20 + $0x1e8] sm:%s12] %v143
          %v145 = vld [vmem:[%s19 + $0x1f0] sm:%s12]
          %146 = vst [vmem:[%s20 + $0x1f0] sm:%s12] %v145
          %v147 = vld [vmem:[%s19 + $0x1f8] sm:%s12]
          %148 = vst [vmem:[%s20 + $0x1f8] sm:%s12] %v147
        $region18: #{reverse.1} parent=12 // loop_footer
          %s18 = sadd.s32 1, %s14
        $region19: #{reverse.1} parent=12 // loop_footer_branch
          %13 = sbr.rel target = $region15
        $region20: #{reverse.1} parent=12 // loop_exit
          _
      $region13: #{reverse.1} parent=4 // pred_fallthru
        _
    $region5: #{reverse.1} parent=1 // pred_fallthru
      _
    %289 = vnop
    %v290 = vld [vmem:[#allocation0] sm:$0xff]
    %291 = vperm.xlu0 %4, %v290
    %v292 = vpop.permute.xlu0 %291
    %293 = vst [vmem:[#allocation1] sm:$0xff] %v292
    %s294 = scalar_lea.vmem [#allocation1], 8
    %s295 = scalar_lea.vmem [#allocation0], 8
    %v296 = vld [vmem:[%s295] sm:$0xff]
    %297 = vperm.xlu0 %4, %v296
    %v298 = vpop.permute.xlu0 %297
    %299 = vst [vmem:[%s294] sm:$0xff] %v298
    %s300 = scalar_lea.vmem [#allocation1], 16
    %s301 = scalar_lea.vmem [#allocation0], 16
    %v302 = vld [vmem:[%s301] sm:$0xff]
    %303 = vperm.xlu0 %4, %v302
    %v304 = vpop.permute.xlu0 %303
    %305 = vst [vmem:[%s300] sm:$0xff] %v304
    %s306 = scalar_lea.vmem [#allocation1], 24
    %s307 = scalar_lea.vmem [#allocation0], 24
    %v308 = vld [vmem:[%s307] sm:$0xff]
    %309 = vperm.xlu0 %4, %v308
    %v310 = vpop.permute.xlu0 %309
    %311 = vst [vmem:[%s306] sm:$0xff] %v310
    %s312 = scalar_lea.vmem [#allocation1], 32
    %s313 = scalar_lea.vmem [#allocation0], 32
    %v314 = vld [vmem:[%s313] sm:$0xff]
    %315 = vperm.xlu0 %4, %v314
    %v316 = vpop.permute.xlu0 %315
    %317 = vst [vmem:[%s312] sm:$0xff] %v316
    %s318 = scalar_lea.vmem [#allocation1], 40
    %s319 = scalar_lea.vmem [#allocation0], 40
    %v320 = vld [vmem:[%s319] sm:$0xff]
    %321 = vperm.xlu0 %4, %v320
    %v322 = vpop.permute.xlu0 %321
    %323 = vst [vmem:[%s318] sm:$0xff] %v322
    %s324 = scalar_lea.vmem [#allocation1], 48
    %s325 = scalar_lea.vmem [#allocation0], 48
    %v326 = vld [vmem:[%s325] sm:$0xff]
    %327 = vperm.xlu0 %4, %v326
    %v328 = vpop.permute.xlu0 %327
    %329 = vst [vmem:[%s324] sm:$0xff] %v328
    %s330 = scalar_lea.vmem [#allocation1], 56
    %s331 = scalar_lea.vmem [#allocation0], 56
    %v332 = vld [vmem:[%s331] sm:$0xff]
    %333 = vperm.xlu0 %4, %v332
    %v334 = vpop.permute.xlu0 %333
    %335 = vst [vmem:[%s330] sm:$0xff] %v334
    %s336 = scalar_lea.vmem [#allocation1], 64
    %s337 = scalar_lea.vmem [#allocation0], 64
    %v338 = vld [vmem:[%s337] sm:$0xff]
    %339 = vperm.xlu0 %4, %v338
    %v340 = vpop.permute.xlu0 %339
    %341 = vst [vmem:[%s336] sm:$0xff] %v340
    %s342 = scalar_lea.vmem [#allocation1], 72
    %s343 = scalar_lea.vmem [#allocation0], 72
    %v344 = vld [vmem:[%s343] sm:$0xff]
    %345 = vperm.xlu0 %4, %v344
    %v346 = vpop.permute.xlu0 %345
    %347 = vst [vmem:[%s342] sm:$0xff] %v346
    %s348 = scalar_lea.vmem [#allocation1], 80
    %s349 = scalar_lea.vmem [#allocation0], 80
    %v350 = vld [vmem:[%s349] sm:$0xff]
    %351 = vperm.xlu0 %4, %v350
    %v352 = vpop.permute.xlu0 %351
    %353 = vst [vmem:[%s348] sm:$0xff] %v352
    %s354 = scalar_lea.vmem [#allocation1], 88
    %s355 = scalar_lea.vmem [#allocation0], 88
    %v356 = vld [vmem:[%s355] sm:$0xff]
    %357 = vperm.xlu0 %4, %v356
    %v358 = vpop.permute.xlu0 %357
    %359 = vst [vmem:[%s354] sm:$0xff] %v358
    %s360 = scalar_lea.vmem [#allocation1], 96
    %s361 = scalar_lea.vmem [#allocation0], 96
    %v362 = vld [vmem:[%s361] sm:$0xff]
    %363 = vperm.xlu0 %4, %v362
    %v364 = vpop.permute.xlu0 %363
    %365 = vst [vmem:[%s360] sm:$0xff] %v364
    %s366 = scalar_lea.vmem [#allocation1], 104
    %s367 = scalar_lea.vmem [#allocation0], 104
    %v368 = vld [vmem:[%s367] sm:$0xff]
    %369 = vperm.xlu0 %4, %v368
    %v370 = vpop.permute.xlu0 %369
    %371 = vst [vmem:[%s366] sm:$0xff] %v370
    %s372 = scalar_lea.vmem [#allocation1], 112
    %s373 = scalar_lea.vmem [#allocation0], 112
    %v374 = vld [vmem:[%s373] sm:$0xff]
    %375 = vperm.xlu0 %4, %v374
    %v376 = vpop.permute.xlu0 %375
    %377 = vst [vmem:[%s372] sm:$0xff] %v376
    %s378 = scalar_lea.vmem [#allocation1], 120
    %s379 = scalar_lea.vmem [#allocation0], 120
    %v380 = vld [vmem:[%s379] sm:$0xff]
    %381 = vperm.xlu0 %4, %v380
    %v382 = vpop.permute.xlu0 %381
    %383 = vst [vmem:[%s378] sm:$0xff] %v382
    %s384 = scalar_lea.vmem [#allocation1], 128
    %s385 = scalar_lea.vmem [#allocation0], 128
    %v386 = vld [vmem:[%s385] sm:$0xff]
    %387 = vperm.xlu0 %4, %v386
    %v388 = vpop.permute.xlu0 %387
    %389 = vst [vmem:[%s384] sm:$0xff] %v388
    %s390 = scalar_lea.vmem [#allocation1], 136
    %s391 = scalar_lea.vmem [#allocation0], 136
    %v392 = vld [vmem:[%s391] sm:$0xff]
    %393 = vperm.xlu0 %4, %v392
    %v394 = vpop.permute.xlu0 %393
    %395 = vst [vmem:[%s390] sm:$0xff] %v394
    %s396 = scalar_lea.vmem [#allocation1], 144
    %s397 = scalar_lea.vmem [#allocation0], 144
    %v398 = vld [vmem:[%s397] sm:$0xff]
    %399 = vperm.xlu0 %4, %v398
    %v400 = vpop.permute.xlu0 %399
    %401 = vst [vmem:[%s396] sm:$0xff] %v400
    %s402 = scalar_lea.vmem [#allocation1], 152
    %s403 = scalar_lea.vmem [#allocation0], 152
    %v404 = vld [vmem:[%s403] sm:$0xff]
    %405 = vperm.xlu0 %4, %v404
    %v406 = vpop.permute.xlu0 %405
    %407 = vst [vmem:[%s402] sm:$0xff] %v406
    %s408 = scalar_lea.vmem [#allocation1], 160
    %s409 = scalar_lea.vmem [#allocation0], 160
    %v410 = vld [vmem:[%s409] sm:$0xff]
    %411 = vperm.xlu0 %4, %v410
    %v412 = vpop.permute.xlu0 %411
    %413 = vst [vmem:[%s408] sm:$0xff] %v412
    %s414 = scalar_lea.vmem [#allocation1], 168
    %s415 = scalar_lea.vmem [#allocation0], 168
    %v416 = vld [vmem:[%s415] sm:$0xff]
    %417 = vperm.xlu0 %4, %v416
    %v418 = vpop.permute.xlu0 %417
    %419 = vst [vmem:[%s414] sm:$0xff] %v418
    %s420 = scalar_lea.vmem [#allocation1], 176
    %s421 = scalar_lea.vmem [#allocation0], 176
    %v422 = vld [vmem:[%s421] sm:$0xff]
    %423 = vperm.xlu0 %4, %v422
    %v424 = vpop.permute.xlu0 %423
    %425 = vst [vmem:[%s420] sm:$0xff] %v424
    %s426 = scalar_lea.vmem [#allocation1], 184
    %s427 = scalar_lea.vmem [#allocation0], 184
    %v428 = vld [vmem:[%s427] sm:$0xff]
    %429 = vperm.xlu0 %4, %v428
    %v430 = vpop.permute.xlu0 %429
    %431 = vst [vmem:[%s426] sm:$0xff] %v430
    %s432 = scalar_lea.vmem [#allocation1], 192
    %s433 = scalar_lea.vmem [#allocation0], 192
    %v434 = vld [vmem:[%s433] sm:$0xff]
    %435 = vperm.xlu0 %4, %v434
    %v436 = vpop.permute.xlu0 %435
    %437 = vst [vmem:[%s432] sm:$0xff] %v436
    %s438 = scalar_lea.vmem [#allocation1], 200
    %s439 = scalar_lea.vmem [#allocation0], 200
    %v440 = vld [vmem:[%s439] sm:$0xff]
    %441 = vperm.xlu0 %4, %v440
    %v442 = vpop.permute.xlu0 %441
    %443 = vst [vmem:[%s438] sm:$0xff] %v442
    %s444 = scalar_lea.vmem [#allocation1], 208
    %s445 = scalar_lea.vmem [#allocation0], 208
    %v446 = vld [vmem:[%s445] sm:$0xff]
    %447 = vperm.xlu0 %4, %v446
    %v448 = vpop.permute.xlu0 %447
    %449 = vst [vmem:[%s444] sm:$0xff] %v448
    %s450 = scalar_lea.vmem [#allocation1], 216
    %s451 = scalar_lea.vmem [#allocation0], 216
    %v452 = vld [vmem:[%s451] sm:$0xff]
    %453 = vperm.xlu0 %4, %v452
    %v454 = vpop.permute.xlu0 %453
    %455 = vst [vmem:[%s450] sm:$0xff] %v454
    %s456 = scalar_lea.vmem [#allocation1], 224
    %s457 = scalar_lea.vmem [#allocation0], 224
    %v458 = vld [vmem:[%s457] sm:$0xff]
    %459 = vperm.xlu0 %4, %v458
    %v460 = vpop.permute.xlu0 %459
    %461 = vst [vmem:[%s456] sm:$0xff] %v460
    %s462 = scalar_lea.vmem [#allocation1], 232
    %s463 = scalar_lea.vmem [#allocation0], 232
    %v464 = vld [vmem:[%s463] sm:$0xff]
    %465 = vperm.xlu0 %4, %v464
    %v466 = vpop.permute.xlu0 %465
    %467 = vst [vmem:[%s462] sm:$0xff] %v466
    %s468 = scalar_lea.vmem [#allocation1], 240
    %s469 = scalar_lea.vmem [#allocation0], 240
    %v470 = vld [vmem:[%s469] sm:$0xff]
    %471 = vperm.xlu0 %4, %v470
    %v472 = vpop.permute.xlu0 %471
    %473 = vst [vmem:[%s468] sm:$0xff] %v472
    %s474 = scalar_lea.vmem [#allocation1], 248
    %s475 = scalar_lea.vmem [#allocation0], 248
    %v476 = vld [vmem:[%s475] sm:$0xff]
    %477 = vperm.xlu0 %4, %v476
    %v478 = vpop.permute.xlu0 %477
    %479 = vst [vmem:[%s474] sm:$0xff] %v478
    %s480 = scalar_lea.vmem [#allocation1], 256
    %s481 = scalar_lea.vmem [#allocation0], 256
    %v482 = vld [vmem:[%s481] sm:$0xff]
    %483 = vperm.xlu0 %4, %v482
    %v484 = vpop.permute.xlu0 %483
    %485 = vst [vmem:[%s480] sm:$0xff] %v484
    %s486 = scalar_lea.vmem [#allocation1], 264
    %s487 = scalar_lea.vmem [#allocation0], 264
    %v488 = vld [vmem:[%s487] sm:$0xff]
    %489 = vperm.xlu0 %4, %v488
    %v490 = vpop.permute.xlu0 %489
    %491 = vst [vmem:[%s486] sm:$0xff] %v490
    %s492 = scalar_lea.vmem [#allocation1], 272
    %s493 = scalar_lea.vmem [#allocation0], 272
    %v494 = vld [vmem:[%s493] sm:$0xff]
    %495 = vperm.xlu0 %4, %v494
    %v496 = vpop.permute.xlu0 %495
    %497 = vst [vmem:[%s492] sm:$0xff] %v496
    %s498 = scalar_lea.vmem [#allocation1], 280
    %s499 = scalar_lea.vmem [#allocation0], 280
    %v500 = vld [vmem:[%s499] sm:$0xff]
    %501 = vperm.xlu0 %4, %v500
    %v502 = vpop.permute.xlu0 %501
    %503 = vst [vmem:[%s498] sm:$0xff] %v502
    %s504 = scalar_lea.vmem [#allocation1], 288
    %s505 = scalar_lea.vmem [#allocation0], 288
    %v506 = vld [vmem:[%s505] sm:$0xff]
    %507 = vperm.xlu0 %4, %v506
    %v508 = vpop.permute.xlu0 %507
    %509 = vst [vmem:[%s504] sm:$0xff] %v508
    %s510 = scalar_lea.vmem [#allocation1], 296
    %s511 = scalar_lea.vmem [#allocation0], 296
    %v512 = vld [vmem:[%s511] sm:$0xff]
    %513 = vperm.xlu0 %4, %v512
    %v514 = vpop.permute.xlu0 %513
    %515 = vst [vmem:[%s510] sm:$0xff] %v514
    %s516 = scalar_lea.vmem [#allocation1], 304
    %s517 = scalar_lea.vmem [#allocation0], 304
    %v518 = vld [vmem:[%s517] sm:$0xff]
    %519 = vperm.xlu0 %4, %v518
    %v520 = vpop.permute.xlu0 %519
    %521 = vst [vmem:[%s516] sm:$0xff] %v520
    %s522 = scalar_lea.vmem [#allocation1], 312
    %s523 = scalar_lea.vmem [#allocation0], 312
    %v524 = vld [vmem:[%s523] sm:$0xff]
    %525 = vperm.xlu0 %4, %v524
    %v526 = vpop.permute.xlu0 %525
    %527 = vst [vmem:[%s522] sm:$0xff] %v526
    %s528 = scalar_lea.vmem [#allocation1], 320
    %s529 = scalar_lea.vmem [#allocation0], 320
    %v530 = vld [vmem:[%s529] sm:$0xff]
    %531 = vperm.xlu0 %4, %v530
    %v532 = vpop.permute.xlu0 %531
    %533 = vst [vmem:[%s528] sm:$0xff] %v532
    %s534 = scalar_lea.vmem [#allocation1], 328
    %s535 = scalar_lea.vmem [#allocation0], 328
    %v536 = vld [vmem:[%s535] sm:$0xff]
    %537 = vperm.xlu0 %4, %v536
    %v538 = vpop.permute.xlu0 %537
    %539 = vst [vmem:[%s534] sm:$0xff] %v538
    %s540 = scalar_lea.vmem [#allocation1], 336
    %s541 = scalar_lea.vmem [#allocation0], 336
    %v542 = vld [vmem:[%s541] sm:$0xff]
    %543 = vperm.xlu0 %4, %v542
    %v544 = vpop.permute.xlu0 %543
    %545 = vst [vmem:[%s540] sm:$0xff] %v544
    %s546 = scalar_lea.vmem [#allocation1], 344
    %s547 = scalar_lea.vmem [#allocation0], 344
    %v548 = vld [vmem:[%s547] sm:$0xff]
    %549 = vperm.xlu0 %4, %v548
    %v550 = vpop.permute.xlu0 %549
    %551 = vst [vmem:[%s546] sm:$0xff] %v550
    %s552 = scalar_lea.vmem [#allocation1], 352
    %s553 = scalar_lea.vmem [#allocation0], 352
    %v554 = vld [vmem:[%s553] sm:$0xff]
    %555 = vperm.xlu0 %4, %v554
    %v556 = vpop.permute.xlu0 %555
    %557 = vst [vmem:[%s552] sm:$0xff] %v556
    %s558 = scalar_lea.vmem [#allocation1], 360
    %s559 = scalar_lea.vmem [#allocation0], 360
    %v560 = vld [vmem:[%s559] sm:$0xff]
    %561 = vperm.xlu0 %4, %v560
    %v562 = vpop.permute.xlu0 %561
    %563 = vst [vmem:[%s558] sm:$0xff] %v562
    %s564 = scalar_lea.vmem [#allocation1], 368
    %s565 = scalar_lea.vmem [#allocation0], 368
    %v566 = vld [vmem:[%s565] sm:$0xff]
    %567 = vperm.xlu0 %4, %v566
    %v568 = vpop.permute.xlu0 %567
    %569 = vst [vmem:[%s564] sm:$0xff] %v568
    %s570 = scalar_lea.vmem [#allocation1], 376
    %s571 = scalar_lea.vmem [#allocation0], 376
    %v572 = vld [vmem:[%s571] sm:$0xff]
    %573 = vperm.xlu0 %4, %v572
    %v574 = vpop.permute.xlu0 %573
    %575 = vst [vmem:[%s570] sm:$0xff] %v574
    %s576 = scalar_lea.vmem [#allocation1], 384
    %s577 = scalar_lea.vmem [#allocation0], 384
    %v578 = vld [vmem:[%s577] sm:$0xff]
    %579 = vperm.xlu0 %4, %v578
    %v580 = vpop.permute.xlu0 %579
    %581 = vst [vmem:[%s576] sm:$0xff] %v580
    %s582 = scalar_lea.vmem [#allocation1], 392
    %s583 = scalar_lea.vmem [#allocation0], 392
    %v584 = vld [vmem:[%s583] sm:$0xff]
    %585 = vperm.xlu0 %4, %v584
    %v586 = vpop.permute.xlu0 %585
    %587 = vst [vmem:[%s582] sm:$0xff] %v586
    %s588 = scalar_lea.vmem [#allocation1], 400
    %s589 = scalar_lea.vmem [#allocation0], 400
    %v590 = vld [vmem:[%s589] sm:$0xff]
    %591 = vperm.xlu0 %4, %v590
    %v592 = vpop.permute.xlu0 %591
    %593 = vst [vmem:[%s588] sm:$0xff] %v592
    %s594 = scalar_lea.vmem [#allocation1], 408
    %s595 = scalar_lea.vmem [#allocation0], 408
    %v596 = vld [vmem:[%s595] sm:$0xff]
    %597 = vperm.xlu0 %4, %v596
    %v598 = vpop.permute.xlu0 %597
    %599 = vst [vmem:[%s594] sm:$0xff] %v598
    %s600 = scalar_lea.vmem [#allocation1], 416
    %s601 = scalar_lea.vmem [#allocation0], 416
    %v602 = vld [vmem:[%s601] sm:$0xff]
    %603 = vperm.xlu0 %4, %v602
    %v604 = vpop.permute.xlu0 %603
    %605 = vst [vmem:[%s600] sm:$0xff] %v604
    %s606 = scalar_lea.vmem [#allocation1], 424
    %s607 = scalar_lea.vmem [#allocation0], 424
    %v608 = vld [vmem:[%s607] sm:$0xff]
    %609 = vperm.xlu0 %4, %v608
    %v610 = vpop.permute.xlu0 %609
    %611 = vst [vmem:[%s606] sm:$0xff] %v610
    %s612 = scalar_lea.vmem [#allocation1], 432
    %s613 = scalar_lea.vmem [#allocation0], 432
    %v614 = vld [vmem:[%s613] sm:$0xff]
    %615 = vperm.xlu0 %4, %v614
    %v616 = vpop.permute.xlu0 %615
    %617 = vst [vmem:[%s612] sm:$0xff] %v616
    %s618 = scalar_lea.vmem [#allocation1], 440
    %s619 = scalar_lea.vmem [#allocation0], 440
    %v620 = vld [vmem:[%s619] sm:$0xff]
    %621 = vperm.xlu0 %4, %v620
    %v622 = vpop.permute.xlu0 %621
    %623 = vst [vmem:[%s618] sm:$0xff] %v622
    %s624 = scalar_lea.vmem [#allocation1], 448
    %s625 = scalar_lea.vmem [#allocation0], 448
    %v626 = vld [vmem:[%s625] sm:$0xff]
    %627 = vperm.xlu0 %4, %v626
    %v628 = vpop.permute.xlu0 %627
    %629 = vst [vmem:[%s624] sm:$0xff] %v628
    %s630 = scalar_lea.vmem [#allocation1], 456
    %s631 = scalar_lea.vmem [#allocation0], 456
    %v632 = vld [vmem:[%s631] sm:$0xff]
    %633 = vperm.xlu0 %4, %v632
    %v634 = vpop.permute.xlu0 %633
    %635 = vst [vmem:[%s630] sm:$0xff] %v634
    %s636 = scalar_lea.vmem [#allocation1], 464
    %s637 = scalar_lea.vmem [#allocation0], 464
    %v638 = vld [vmem:[%s637] sm:$0xff]
    %639 = vperm.xlu0 %4, %v638
    %v640 = vpop.permute.xlu0 %639
    %641 = vst [vmem:[%s636] sm:$0xff] %v640
    %s642 = scalar_lea.vmem [#allocation1], 472
    %s643 = scalar_lea.vmem [#allocation0], 472
    %v644 = vld [vmem:[%s643] sm:$0xff]
    %645 = vperm.xlu0 %4, %v644
    %v646 = vpop.permute.xlu0 %645
    %647 = vst [vmem:[%s642] sm:$0xff] %v646
    %s648 = scalar_lea.vmem [#allocation1], 480
    %s649 = scalar_lea.vmem [#allocation0], 480
    %v650 = vld [vmem:[%s649] sm:$0xff]
    %651 = vperm.xlu0 %4, %v650
    %v652 = vpop.permute.xlu0 %651
    %653 = vst [vmem:[%s648] sm:$0xff] %v652
    %s654 = scalar_lea.vmem [#allocation1], 488
    %s655 = scalar_lea.vmem [#allocation0], 488
    %v656 = vld [vmem:[%s655] sm:$0xff]
    %657 = vperm.xlu0 %4, %v656
    %v658 = vpop.permute.xlu0 %657
    %659 = vst [vmem:[%s654] sm:$0xff] %v658
    %s660 = scalar_lea.vmem [#allocation1], 496
    %s661 = scalar_lea.vmem [#allocation0], 496
    %v662 = vld [vmem:[%s661] sm:$0xff]
    %663 = vperm.xlu0 %4, %v662
    %v664 = vpop.permute.xlu0 %663
    %665 = vst [vmem:[%s660] sm:$0xff] %v664
    %s666 = scalar_lea.vmem [#allocation1], 504
    %s667 = scalar_lea.vmem [#allocation0], 504
    %v668 = vld [vmem:[%s667] sm:$0xff]
    %669 = vperm.xlu0 %4, %v668
    %v670 = vpop.permute.xlu0 %669
    %671 = vst [vmem:[%s666] sm:$0xff] %v670
    // Predicated region
    $region36: #{reverse.1} parent=1 // pred_check
      _
    $region37: #{reverse.1} parent=1 // pred_check_branch
      %673 = sbr.rel (0) target = $region39
    $region38: #{reverse.1} parent=1 // pred_region
      // Predicated region
      $region40: #{reverse.1} parent=38 // pred_check
        _
      $region41: #{reverse.1} parent=38 // pred_check_branch
        %675 = sbr.rel (0) target = $region43
      $region42: #{reverse.1} parent=38 // pred_region
        // Predicated region
        $region55: #{reverse.1} parent=42 // pred_check
          _
        $region56: #{reverse.1} parent=42 // pred_check_branch
          %817 = sbr.rel (0) target = $region58
        $region57: #{reverse.1} parent=42 // pred_region
          loop: start=0, step=1, limit=1
          $region59: #{reverse.1} parent=57 // loop_pre_header
            _
          $region60: #{reverse.1} parent=57 // loop_header
            %s819 = sphi 0, %s823
            %p820 = scmp.ge.s32.totalorder %s819, 1
            %s824 = sphi [#allocation1], [#allocation1]
            %s825 = sphi %s1, %s1
          $region61: #{reverse.1} parent=57 // loop_header_branch
            %822 = sbr.rel (%p820) target = $region65
          $region62: #{reverse.1} parent=57 // loop_body
            %v826 = vld [vmem:[%s824] sm:$0xff]
            %827 = vst [vmem:[%s825] sm:$0xff] %v826
            %v828 = vld [vmem:[%s824 + $0x8] sm:$0xff]
            %829 = vst [vmem:[%s825 + $0x8] sm:$0xff] %v828
            %v830 = vld [vmem:[%s824 + $0x10] sm:$0xff]
            %831 = vst [vmem:[%s825 + $0x10] sm:$0xff] %v830
            %v832 = vld [vmem:[%s824 + $0x18] sm:$0xff]
            %833 = vst [vmem:[%s825 + $0x18] sm:$0xff] %v832
            %v834 = vld [vmem:[%s824 + $0x20] sm:$0xff]
            %835 = vst [vmem:[%s825 + $0x20] sm:$0xff] %v834
            %v836 = vld [vmem:[%s824 + $0x28] sm:$0xff]
            %837 = vst [vmem:[%s825 + $0x28] sm:$0xff] %v836
            %v838 = vld [vmem:[%s824 + $0x30] sm:$0xff]
            %839 = vst [vmem:[%s825 + $0x30] sm:$0xff] %v838
            %v840 = vld [vmem:[%s824 + $0x38] sm:$0xff]
            %841 = vst [vmem:[%s825 + $0x38] sm:$0xff] %v840
            %v842 = vld [vmem:[%s824 + $0x40] sm:$0xff]
            %843 = vst [vmem:[%s825 + $0x40] sm:$0xff] %v842
            %v844 = vld [vmem:[%s824 + $0x48] sm:$0xff]
            %845 = vst [vmem:[%s825 + $0x48] sm:$0xff] %v844
            %v846 = vld [vmem:[%s824 + $0x50] sm:$0xff]
            %847 = vst [vmem:[%s825 + $0x50] sm:$0xff] %v846
            %v848 = vld [vmem:[%s824 + $0x58] sm:$0xff]
            %849 = vst [vmem:[%s825 + $0x58] sm:$0xff] %v848
            %v850 = vld [vmem:[%s824 + $0x60] sm:$0xff]
            %851 = vst [vmem:[%s825 + $0x60] sm:$0xff] %v850
            %v852 = vld [vmem:[%s824 + $0x68] sm:$0xff]
            %853 = vst [vmem:[%s825 + $0x68] sm:$0xff] %v852
            %v854 = vld [vmem:[%s824 + $0x70] sm:$0xff]
            %855 = vst [vmem:[%s825 + $0x70] sm:$0xff] %v854
            %v856 = vld [vmem:[%s824 + $0x78] sm:$0xff]
            %857 = vst [vmem:[%s825 + $0x78] sm:$0xff] %v856
            %v858 = vld [vmem:[%s824 + $0x80] sm:$0xff]
            %859 = vst [vmem:[%s825 + $0x80] sm:$0xff] %v858
            %v860 = vld [vmem:[%s824 + $0x88] sm:$0xff]
            %861 = vst [vmem:[%s825 + $0x88] sm:$0xff] %v860
            %v862 = vld [vmem:[%s824 + $0x90] sm:$0xff]
            %863 = vst [vmem:[%s825 + $0x90] sm:$0xff] %v862
            %v864 = vld [vmem:[%s824 + $0x98] sm:$0xff]
            %865 = vst [vmem:[%s825 + $0x98] sm:$0xff] %v864
            %v866 = vld [vmem:[%s824 + $0xa0] sm:$0xff]
            %867 = vst [vmem:[%s825 + $0xa0] sm:$0xff] %v866
            %v868 = vld [vmem:[%s824 + $0xa8] sm:$0xff]
            %869 = vst [vmem:[%s825 + $0xa8] sm:$0xff] %v868
            %v870 = vld [vmem:[%s824 + $0xb0] sm:$0xff]
            %871 = vst [vmem:[%s825 + $0xb0] sm:$0xff] %v870
            %v872 = vld [vmem:[%s824 + $0xb8] sm:$0xff]
            %873 = vst [vmem:[%s825 + $0xb8] sm:$0xff] %v872
            %v874 = vld [vmem:[%s824 + $0xc0] sm:$0xff]
            %875 = vst [vmem:[%s825 + $0xc0] sm:$0xff] %v874
            %v876 = vld [vmem:[%s824 + $0xc8] sm:$0xff]
            %877 = vst [vmem:[%s825 + $0xc8] sm:$0xff] %v876
            %v878 = vld [vmem:[%s824 + $0xd0] sm:$0xff]
            %879 = vst [vmem:[%s825 + $0xd0] sm:$0xff] %v878
            %v880 = vld [vmem:[%s824 + $0xd8] sm:$0xff]
            %881 = vst [vmem:[%s825 + $0xd8] sm:$0xff] %v880
            %v882 = vld [vmem:[%s824 + $0xe0] sm:$0xff]
            %883 = vst [vmem:[%s825 + $0xe0] sm:$0xff] %v882
            %v884 = vld [vmem:[%s824 + $0xe8] sm:$0xff]
            %885 = vst [vmem:[%s825 + $0xe8] sm:$0xff] %v884
            %v886 = vld [vmem:[%s824 + $0xf0] sm:$0xff]
            %887 = vst [vmem:[%s825 + $0xf0] sm:$0xff] %v886
            %v888 = vld [vmem:[%s824 + $0xf8] sm:$0xff]
            %889 = vst [vmem:[%s825 + $0xf8] sm:$0xff] %v888
            %v890 = vld [vmem:[%s824 + $0x100] sm:$0xff]
            %891 = vst [vmem:[%s825 + $0x100] sm:$0xff] %v890
            %v892 = vld [vmem:[%s824 + $0x108] sm:$0xff]
            %893 = vst [vmem:[%s825 + $0x108] sm:$0xff] %v892
            %v894 = vld [vmem:[%s824 + $0x110] sm:$0xff]
            %895 = vst [vmem:[%s825 + $0x110] sm:$0xff] %v894
            %v896 = vld [vmem:[%s824 + $0x118] sm:$0xff]
            %897 = vst [vmem:[%s825 + $0x118] sm:$0xff] %v896
            %v898 = vld [vmem:[%s824 + $0x120] sm:$0xff]
            %899 = vst [vmem:[%s825 + $0x120] sm:$0xff] %v898
            %v900 = vld [vmem:[%s824 + $0x128] sm:$0xff]
            %901 = vst [vmem:[%s825 + $0x128] sm:$0xff] %v900
            %v902 = vld [vmem:[%s824 + $0x130] sm:$0xff]
            %903 = vst [vmem:[%s825 + $0x130] sm:$0xff] %v902
            %v904 = vld [vmem:[%s824 + $0x138] sm:$0xff]
            %905 = vst [vmem:[%s825 + $0x138] sm:$0xff] %v904
            %v906 = vld [vmem:[%s824 + $0x140] sm:$0xff]
            %907 = vst [vmem:[%s825 + $0x140] sm:$0xff] %v906
            %v908 = vld [vmem:[%s824 + $0x148] sm:$0xff]
            %909 = vst [vmem:[%s825 + $0x148] sm:$0xff] %v908
            %v910 = vld [vmem:[%s824 + $0x150] sm:$0xff]
            %911 = vst [vmem:[%s825 + $0x150] sm:$0xff] %v910
            %v912 = vld [vmem:[%s824 + $0x158] sm:$0xff]
            %913 = vst [vmem:[%s825 + $0x158] sm:$0xff] %v912
            %v914 = vld [vmem:[%s824 + $0x160] sm:$0xff]
            %915 = vst [vmem:[%s825 + $0x160] sm:$0xff] %v914
            %v916 = vld [vmem:[%s824 + $0x168] sm:$0xff]
            %917 = vst [vmem:[%s825 + $0x168] sm:$0xff] %v916
            %v918 = vld [vmem:[%s824 + $0x170] sm:$0xff]
            %919 = vst [vmem:[%s825 + $0x170] sm:$0xff] %v918
            %v920 = vld [vmem:[%s824 + $0x178] sm:$0xff]
            %921 = vst [vmem:[%s825 + $0x178] sm:$0xff] %v920
            %v922 = vld [vmem:[%s824 + $0x180] sm:$0xff]
            %923 = vst [vmem:[%s825 + $0x180] sm:$0xff] %v922
            %v924 = vld [vmem:[%s824 + $0x188] sm:$0xff]
            %925 = vst [vmem:[%s825 + $0x188] sm:$0xff] %v924
            %v926 = vld [vmem:[%s824 + $0x190] sm:$0xff]
            %927 = vst [vmem:[%s825 + $0x190] sm:$0xff] %v926
            %v928 = vld [vmem:[%s824 + $0x198] sm:$0xff]
            %929 = vst [vmem:[%s825 + $0x198] sm:$0xff] %v928
            %v930 = vld [vmem:[%s824 + $0x1a0] sm:$0xff]
            %931 = vst [vmem:[%s825 + $0x1a0] sm:$0xff] %v930
            %v932 = vld [vmem:[%s824 + $0x1a8] sm:$0xff]
            %933 = vst [vmem:[%s825 + $0x1a8] sm:$0xff] %v932
            %v934 = vld [vmem:[%s824 + $0x1b0] sm:$0xff]
            %935 = vst [vmem:[%s825 + $0x1b0] sm:$0xff] %v934
            %v936 = vld [vmem:[%s824 + $0x1b8] sm:$0xff]
            %937 = vst [vmem:[%s825 + $0x1b8] sm:$0xff] %v936
            %v938 = vld [vmem:[%s824 + $0x1c0] sm:$0xff]
            %939 = vst [vmem:[%s825 + $0x1c0] sm:$0xff] %v938
            %v940 = vld [vmem:[%s824 + $0x1c8] sm:$0xff]
            %941 = vst [vmem:[%s825 + $0x1c8] sm:$0xff] %v940
            %v942 = vld [vmem:[%s824 + $0x1d0] sm:$0xff]
            %943 = vst [vmem:[%s825 + $0x1d0] sm:$0xff] %v942
            %v944 = vld [vmem:[%s824 + $0x1d8] sm:$0xff]
            %945 = vst [vmem:[%s825 + $0x1d8] sm:$0xff] %v944
            %v946 = vld [vmem:[%s824 + $0x1e0] sm:$0xff]
            %947 = vst [vmem:[%s825 + $0x1e0] sm:$0xff] %v946
            %v948 = vld [vmem:[%s824 + $0x1e8] sm:$0xff]
            %949 = vst [vmem:[%s825 + $0x1e8] sm:$0xff] %v948
            %v950 = vld [vmem:[%s824 + $0x1f0] sm:$0xff]
            %951 = vst [vmem:[%s825 + $0x1f0] sm:$0xff] %v950
            %v952 = vld [vmem:[%s824 + $0x1f8] sm:$0xff]
            %953 = vst [vmem:[%s825 + $0x1f8] sm:$0xff] %v952
          $region63: #{reverse.1} parent=57 // loop_footer
            %s823 = sadd.s32 1, %s819
          $region64: #{reverse.1} parent=57 // loop_footer_branch
            %818 = sbr.rel target = $region60
          $region65: #{reverse.1} parent=57 // loop_exit
            _
        $region58: #{reverse.1} parent=42 // pred_fallthru
          _
        // Predicated region
        $region66: #{reverse.1} parent=42 // pred_check
          _
        $region67: #{reverse.1} parent=42 // pred_check_branch
          %955 = sbr.rel target = $region69
        $region68: #{reverse.1} parent=42 // pred_region
          _
        $region69: #{reverse.1} parent=42 // pred_fallthru
          _
      $region43: #{reverse.1} parent=38 // pred_fallthru
        _
      // Predicated region
      $region44: #{reverse.1} parent=38 // pred_check
        _
      $region45: #{reverse.1} parent=38 // pred_check_branch
        %677 = sbr.rel target = $region47
      $region46: #{reverse.1} parent=38 // pred_region
        %s679 = ssub.s32 256, 1
        loop: start=0, step=1, limit=1
        $region48: #{reverse.1} parent=46 // loop_pre_header
          _
        $region49: #{reverse.1} parent=46 // loop_header
          %s681 = sphi 0, %s685
          %p682 = scmp.ge.s32.totalorder %s681, 1
          %s686 = sphi [#allocation1], [#allocation1]
          %s687 = sphi %s1, %s1
        $region50: #{reverse.1} parent=46 // loop_header_branch
          %684 = sbr.rel (%p682) target = $region54
        $region51: #{reverse.1} parent=46 // loop_body
          %v688 = vld [vmem:[%s686] sm:%s679]
          %689 = vst [vmem:[%s687] sm:%s679] %v688
          %v690 = vld [vmem:[%s686 + $0x8] sm:%s679]
          %691 = vst [vmem:[%s687 + $0x8] sm:%s679] %v690
          %v692 = vld [vmem:[%s686 + $0x10] sm:%s679]
          %693 = vst [vmem:[%s687 + $0x10] sm:%s679] %v692
          %v694 = vld [vmem:[%s686 + $0x18] sm:%s679]
          %695 = vst [vmem:[%s687 + $0x18] sm:%s679] %v694
          %v696 = vld [vmem:[%s686 + $0x20] sm:%s679]
          %697 = vst [vmem:[%s687 + $0x20] sm:%s679] %v696
          %v698 = vld [vmem:[%s686 + $0x28] sm:%s679]
          %699 = vst [vmem:[%s687 + $0x28] sm:%s679] %v698
          %v700 = vld [vmem:[%s686 + $0x30] sm:%s679]
          %701 = vst [vmem:[%s687 + $0x30] sm:%s679] %v700
          %v702 = vld [vmem:[%s686 + $0x38] sm:%s679]
          %703 = vst [vmem:[%s687 + $0x38] sm:%s679] %v702
          %v704 = vld [vmem:[%s686 + $0x40] sm:%s679]
          %705 = vst [vmem:[%s687 + $0x40] sm:%s679] %v704
          %v706 = vld [vmem:[%s686 + $0x48] sm:%s679]
          %707 = vst [vmem:[%s687 + $0x48] sm:%s679] %v706
          %v708 = vld [vmem:[%s686 + $0x50] sm:%s679]
          %709 = vst [vmem:[%s687 + $0x50] sm:%s679] %v708
          %v710 = vld [vmem:[%s686 + $0x58] sm:%s679]
          %711 = vst [vmem:[%s687 + $0x58] sm:%s679] %v710
          %v712 = vld [vmem:[%s686 + $0x60] sm:%s679]
          %713 = vst [vmem:[%s687 + $0x60] sm:%s679] %v712
          %v714 = vld [vmem:[%s686 + $0x68] sm:%s679]
          %715 = vst [vmem:[%s687 + $0x68] sm:%s679] %v714
          %v716 = vld [vmem:[%s686 + $0x70] sm:%s679]
          %717 = vst [vmem:[%s687 + $0x70] sm:%s679] %v716
          %v718 = vld [vmem:[%s686 + $0x78] sm:%s679]
          %719 = vst [vmem:[%s687 + $0x78] sm:%s679] %v718
          %v720 = vld [vmem:[%s686 + $0x80] sm:%s679]
          %721 = vst [vmem:[%s687 + $0x80] sm:%s679] %v720
          %v722 = vld [vmem:[%s686 + $0x88] sm:%s679]
          %723 = vst [vmem:[%s687 + $0x88] sm:%s679] %v722
          %v724 = vld [vmem:[%s686 + $0x90] sm:%s679]
          %725 = vst [vmem:[%s687 + $0x90] sm:%s679] %v724
          %v726 = vld [vmem:[%s686 + $0x98] sm:%s679]
          %727 = vst [vmem:[%s687 + $0x98] sm:%s679] %v726
          %v728 = vld [vmem:[%s686 + $0xa0] sm:%s679]
          %729 = vst [vmem:[%s687 + $0xa0] sm:%s679] %v728
          %v730 = vld [vmem:[%s686 + $0xa8] sm:%s679]
          %731 = vst [vmem:[%s687 + $0xa8] sm:%s679] %v730
          %v732 = vld [vmem:[%s686 + $0xb0] sm:%s679]
          %733 = vst [vmem:[%s687 + $0xb0] sm:%s679] %v732
          %v734 = vld [vmem:[%s686 + $0xb8] sm:%s679]
          %735 = vst [vmem:[%s687 + $0xb8] sm:%s679] %v734
          %v736 = vld [vmem:[%s686 + $0xc0] sm:%s679]
          %737 = vst [vmem:[%s687 + $0xc0] sm:%s679] %v736
          %v738 = vld [vmem:[%s686 + $0xc8] sm:%s679]
          %739 = vst [vmem:[%s687 + $0xc8] sm:%s679] %v738
          %v740 = vld [vmem:[%s686 + $0xd0] sm:%s679]
          %741 = vst [vmem:[%s687 + $0xd0] sm:%s679] %v740
          %v742 = vld [vmem:[%s686 + $0xd8] sm:%s679]
          %743 = vst [vmem:[%s687 + $0xd8] sm:%s679] %v742
          %v744 = vld [vmem:[%s686 + $0xe0] sm:%s679]
          %745 = vst [vmem:[%s687 + $0xe0] sm:%s679] %v744
          %v746 = vld [vmem:[%s686 + $0xe8] sm:%s679]
          %747 = vst [vmem:[%s687 + $0xe8] sm:%s679] %v746
          %v748 = vld [vmem:[%s686 + $0xf0] sm:%s679]
          %749 = vst [vmem:[%s687 + $0xf0] sm:%s679] %v748
          %v750 = vld [vmem:[%s686 + $0xf8] sm:%s679]
          %751 = vst [vmem:[%s687 + $0xf8] sm:%s679] %v750
          %v752 = vld [vmem:[%s686 + $0x100] sm:%s679]
          %753 = vst [vmem:[%s687 + $0x100] sm:%s679] %v752
          %v754 = vld [vmem:[%s686 + $0x108] sm:%s679]
          %755 = vst [vmem:[%s687 + $0x108] sm:%s679] %v754
          %v756 = vld [vmem:[%s686 + $0x110] sm:%s679]
          %757 = vst [vmem:[%s687 + $0x110] sm:%s679] %v756
          %v758 = vld [vmem:[%s686 + $0x118] sm:%s679]
          %759 = vst [vmem:[%s687 + $0x118] sm:%s679] %v758
          %v760 = vld [vmem:[%s686 + $0x120] sm:%s679]
          %761 = vst [vmem:[%s687 + $0x120] sm:%s679] %v760
          %v762 = vld [vmem:[%s686 + $0x128] sm:%s679]
          %763 = vst [vmem:[%s687 + $0x128] sm:%s679] %v762
          %v764 = vld [vmem:[%s686 + $0x130] sm:%s679]
          %765 = vst [vmem:[%s687 + $0x130] sm:%s679] %v764
          %v766 = vld [vmem:[%s686 + $0x138] sm:%s679]
          %767 = vst [vmem:[%s687 + $0x138] sm:%s679] %v766
          %v768 = vld [vmem:[%s686 + $0x140] sm:%s679]
          %769 = vst [vmem:[%s687 + $0x140] sm:%s679] %v768
          %v770 = vld [vmem:[%s686 + $0x148] sm:%s679]
          %771 = vst [vmem:[%s687 + $0x148] sm:%s679] %v770
          %v772 = vld [vmem:[%s686 + $0x150] sm:%s679]
          %773 = vst [vmem:[%s687 + $0x150] sm:%s679] %v772
          %v774 = vld [vmem:[%s686 + $0x158] sm:%s679]
          %775 = vst [vmem:[%s687 + $0x158] sm:%s679] %v774
          %v776 = vld [vmem:[%s686 + $0x160] sm:%s679]
          %777 = vst [vmem:[%s687 + $0x160] sm:%s679] %v776
          %v778 = vld [vmem:[%s686 + $0x168] sm:%s679]
          %779 = vst [vmem:[%s687 + $0x168] sm:%s679] %v778
          %v780 = vld [vmem:[%s686 + $0x170] sm:%s679]
          %781 = vst [vmem:[%s687 + $0x170] sm:%s679] %v780
          %v782 = vld [vmem:[%s686 + $0x178] sm:%s679]
          %783 = vst [vmem:[%s687 + $0x178] sm:%s679] %v782
          %v784 = vld [vmem:[%s686 + $0x180] sm:%s679]
          %785 = vst [vmem:[%s687 + $0x180] sm:%s679] %v784
          %v786 = vld [vmem:[%s686 + $0x188] sm:%s679]
          %787 = vst [vmem:[%s687 + $0x188] sm:%s679] %v786
          %v788 = vld [vmem:[%s686 + $0x190] sm:%s679]
          %789 = vst [vmem:[%s687 + $0x190] sm:%s679] %v788
          %v790 = vld [vmem:[%s686 + $0x198] sm:%s679]
          %791 = vst [vmem:[%s687 + $0x198] sm:%s679] %v790
          %v792 = vld [vmem:[%s686 + $0x1a0] sm:%s679]
          %793 = vst [vmem:[%s687 + $0x1a0] sm:%s679] %v792
          %v794 = vld [vmem:[%s686 + $0x1a8] sm:%s679]
          %795 = vst [vmem:[%s687 + $0x1a8] sm:%s679] %v794
          %v796 = vld [vmem:[%s686 + $0x1b0] sm:%s679]
          %797 = vst [vmem:[%s687 + $0x1b0] sm:%s679] %v796
          %v798 = vld [vmem:[%s686 + $0x1b8] sm:%s679]
          %799 = vst [vmem:[%s687 + $0x1b8] sm:%s679] %v798
          %v800 = vld [vmem:[%s686 + $0x1c0] sm:%s679]
          %801 = vst [vmem:[%s687 + $0x1c0] sm:%s679] %v800
          %v802 = vld [vmem:[%s686 + $0x1c8] sm:%s679]
          %803 = vst [vmem:[%s687 + $0x1c8] sm:%s679] %v802
          %v804 = vld [vmem:[%s686 + $0x1d0] sm:%s679]
          %805 = vst [vmem:[%s687 + $0x1d0] sm:%s679] %v804
          %v806 = vld [vmem:[%s686 + $0x1d8] sm:%s679]
          %807 = vst [vmem:[%s687 + $0x1d8] sm:%s679] %v806
          %v808 = vld [vmem:[%s686 + $0x1e0] sm:%s679]
          %809 = vst [vmem:[%s687 + $0x1e0] sm:%s679] %v808
          %v810 = vld [vmem:[%s686 + $0x1e8] sm:%s679]
          %811 = vst [vmem:[%s687 + $0x1e8] sm:%s679] %v810
          %v812 = vld [vmem:[%s686 + $0x1f0] sm:%s679]
          %813 = vst [vmem:[%s687 + $0x1f0] sm:%s679] %v812
          %v814 = vld [vmem:[%s686 + $0x1f8] sm:%s679]
          %815 = vst [vmem:[%s687 + $0x1f8] sm:%s679] %v814
        $region52: #{reverse.1} parent=46 // loop_footer
          %s685 = sadd.s32 1, %s681
        $region53: #{reverse.1} parent=46 // loop_footer_branch
          %680 = sbr.rel target = $region49
        $region54: #{reverse.1} parent=46 // loop_exit
          _
      $region47: #{reverse.1} parent=38 // pred_fallthru
        _
    $region39: #{reverse.1} parent=1 // pred_fallthru
      _
    %956 = vnop

</llo_original>
